<compile_context>
chip_gen: v6e
topology: v6e:2x2x1
jax: 0.10.0
libtpu: 0.0.40
codegen_flags: <defaults>
</compile_context>

<pallas_src>
import jax
import jax.numpy as jnp
from jax.experimental import pallas as pl
from jax.experimental.pallas import tpu as pltpu


def word_decoder_kernel(x_ref, wq_ref, bq_ref, wk_ref, bk_ref, wv_ref, bv_ref,
                        w0_ref, b0_ref, w1_ref, b1_ref, w2_ref, b2_ref, o_ref):
    B, seq, in_sz = x_ref.shape
    x2 = x_ref[...].reshape(B * seq, in_sz)         # flat rows for all row-wise matmuls

    # --- SelfAttention (word_SA) --------------------------------------------
    # Three small projections reusing the same x rows (lane-aligned, no fused-QKV slicing).
    q = (jnp.dot(x2, wq_ref[...], preferred_element_type=jnp.float32)
         + bq_ref[...]).reshape(B, seq, in_sz)
    k = (jnp.dot(x2, wk_ref[...], preferred_element_type=jnp.float32)
         + bk_ref[...]).reshape(B, seq, in_sz)
    v = (jnp.dot(x2, wv_ref[...], preferred_element_type=jnp.float32)
         + bv_ref[...]).reshape(B, seq, in_sz)

    # NOTE: the PyTorch SelfAttention builds a triu(-inf) mask when use_mask=True but
    # never applies it, and WordDecoder constructs it with use_mask=False; there is
    # also no 1/sqrt(d) scaling. The effective forward is plain un-masked softmax attn.
    raw = jnp.einsum('bqd,bkd->bqk', q, k, preferred_element_type=jnp.float32)
    m = jnp.max(raw, axis=-1, keepdims=True)
    e = jnp.exp(raw - m)
    scores = e * pl.reciprocal(jnp.sum(e, axis=-1, keepdims=True), approx=True)
    attn = jnp.einsum('bqk,bkd->bqd', scores, v, preferred_element_type=jnp.float32)

    # --- word_network: Linear -> LeakyReLU -> Linear -> LeakyReLU -> Linear -> Softmax
    a2 = attn.reshape(B * seq, in_sz)
    h0 = jnp.dot(a2, w0_ref[...], preferred_element_type=jnp.float32) + b0_ref[...]
    h0 = jnp.where(h0 >= 0, h0, 0.01 * h0)          # LeakyReLU, default slope 0.01
    h1 = jnp.dot(h0, w1_ref[...], preferred_element_type=jnp.float32) + b1_ref[...]
    h1 = jnp.where(h1 >= 0, h1, 0.01 * h1)
    logits = jnp.dot(h1, w2_ref[...], preferred_element_type=jnp.float32) + b2_ref[...]

    lm = jnp.max(logits, axis=-1, keepdims=True)
    le = jnp.exp(logits - lm)
    probs = le / jnp.sum(le, axis=-1, keepdims=True)   # exact divide: rows sum to 1
    o_ref[...] = probs.reshape(B, seq, -1).astype(o_ref.dtype)


def word_decoder(x, wq, bq, wk, bk, wv, bv, w0, b0, w1, b1, w2, b2):
    B, seq, in_sz = x.shape
    vocab_sz = w2.shape[1]

    def full_block(arr):
        # Whole array as one block, constant block index (single grid step).
        return pl.BlockSpec(arr.shape, lambda i, _nd=arr.ndim: (0,) * _nd)

    args = (x, wq, bq, wk, bk, wv, bv, w0, b0, w1, b1, w2, b2)
    return pl.pallas_call(
        word_decoder_kernel,
        out_shape=jax.ShapeDtypeStruct((B, seq, vocab_sz), x.dtype),
        grid=(1,),
        in_specs=[full_block(a) for a in args],
        out_specs=pl.BlockSpec((B, seq, vocab_sz), lambda i: (0, 0, 0)),
        compiler_params=pltpu.CompilerParams(dimension_semantics=("arbitrary",)),
    )(*args)


def init_linear(key, in_sz, out_sz):
    # Matches torch.nn.Linear default init: U(-1/sqrt(in), 1/sqrt(in)) for W and b.
    kw, kb = jax.random.split(key)
    bound = 1.0 / jnp.sqrt(jnp.float32(in_sz))
    w = jax.random.uniform(kw, (in_sz, out_sz), jnp.float32, -bound, bound)
    b = jax.random.uniform(kb, (1, out_sz), jnp.float32, -bound, bound)
    return w, b


if __name__ == "__main__":
    B, seq, in_sz = 8, 8, 32
    hdn0, hdn1, vocab_sz = 128, 128, 128   # lane-dense MLP widths / vocab (multiple of 128)

    key = jax.random.PRNGKey(0)
    kx, kq, kk, kv, k0, k1, k2 = jax.random.split(key, 7)

    x = jax.random.normal(kx, (B, seq, in_sz), jnp.float32)
    wq, bq = init_linear(kq, in_sz, in_sz)
    wk, bk = init_linear(kk, in_sz, in_sz)
    wv, bv = init_linear(kv, in_sz, in_sz)
    w0, b0 = init_linear(k0, in_sz, hdn0)
    w1, b1 = init_linear(k1, hdn0, hdn1)
    w2, b2 = init_linear(k2, hdn1, vocab_sz)

    out = word_decoder(x, wq, bq, wk, bk, wv, bv, w0, b0, w1, b1, w2, b2)
    jax.block_until_ready(out)

    # Pure-JAX reference (same unmasked/unscaled attention as the PyTorch module).
    q = x @ wq + bq
    k = x @ wk + bk
    v = x @ wv + bv
    raw = jnp.einsum('bqd,bkd->bqk', q, k)
    attn = jnp.einsum('bqk,bkd->bqd', jax.nn.softmax(raw, axis=-1), v)
    h0 = jax.nn.leaky_relu(attn @ w0 + b0, negative_slope=0.01)
    h1 = jax.nn.leaky_relu(h0 @ w1 + b1, negative_slope=0.01)
    ref = jax.nn.softmax(h1 @ w2 + b2, axis=-1)

    # Attention softmax still uses the approx (EUP vrcp) reciprocal -> mildly relaxed tol.
    assert jnp.allclose(out, ref, atol=2e-4, rtol=2e-3), "mismatch vs reference"

    print("KERNEL_OK")
</pallas_src>

<mosaic_0001>
module attributes {stable_mosaic.version = 11 : i64} {
  func.func @word_decoder_kernel(%arg0: i32, %arg1: memref<8x8x32xf32, #tpu.memory_space<vmem>>, %arg2: memref<32x32xf32, #tpu.memory_space<vmem>>, %arg3: memref<1x32xf32, #tpu.memory_space<vmem>>, %arg4: memref<32x32xf32, #tpu.memory_space<vmem>>, %arg5: memref<1x32xf32, #tpu.memory_space<vmem>>, %arg6: memref<32x32xf32, #tpu.memory_space<vmem>>, %arg7: memref<1x32xf32, #tpu.memory_space<vmem>>, %arg8: memref<32x128xf32, #tpu.memory_space<vmem>>, %arg9: memref<1x128xf32, #tpu.memory_space<vmem>>, %arg10: memref<128x128xf32, #tpu.memory_space<vmem>>, %arg11: memref<1x128xf32, #tpu.memory_space<vmem>>, %arg12: memref<128x128xf32, #tpu.memory_space<vmem>>, %arg13: memref<1x128xf32, #tpu.memory_space<vmem>>, %arg14: memref<8x8x128xf32, #tpu.memory_space<vmem>>) attributes {dimension_semantics = [#tpu.dimension_semantics<arbitrary>], iteration_bounds = array<i64: 1>, scalar_prefetch = 0 : i64, scratch_operands = 0 : i64, tpu.core_type = #tpu.core_type<tc>, window_params = [{pipeline_mode = #tpu.pipeline_mode<synchronous>, transform_indices = @transform_0, window_bounds = array<i64: 8, 8, 32>}, {pipeline_mode = #tpu.pipeline_mode<synchronous>, transform_indices = @transform_1, window_bounds = array<i64: 32, 32>}, {pipeline_mode = #tpu.pipeline_mode<synchronous>, transform_indices = @transform_2, window_bounds = array<i64: 1, 32>}, {pipeline_mode = #tpu.pipeline_mode<synchronous>, transform_indices = @transform_3, window_bounds = array<i64: 32, 32>}, {pipeline_mode = #tpu.pipeline_mode<synchronous>, transform_indices = @transform_4, window_bounds = array<i64: 1, 32>}, {pipeline_mode = #tpu.pipeline_mode<synchronous>, transform_indices = @transform_5, window_bounds = array<i64: 32, 32>}, {pipeline_mode = #tpu.pipeline_mode<synchronous>, transform_indices = @transform_6, window_bounds = array<i64: 1, 32>}, {pipeline_mode = #tpu.pipeline_mode<synchronous>, transform_indices = @transform_7, window_bounds = array<i64: 32, 128>}, {pipeline_mode = #tpu.pipeline_mode<synchronous>, transform_indices = @transform_8, window_bounds = array<i64: 1, 128>}, {pipeline_mode = #tpu.pipeline_mode<synchronous>, transform_indices = @transform_9, window_bounds = array<i64: 128, 128>}, {pipeline_mode = #tpu.pipeline_mode<synchronous>, transform_indices = @transform_10, window_bounds = array<i64: 1, 128>}, {pipeline_mode = #tpu.pipeline_mode<synchronous>, transform_indices = @transform_11, window_bounds = array<i64: 128, 128>}, {pipeline_mode = #tpu.pipeline_mode<synchronous>, transform_indices = @transform_12, window_bounds = array<i64: 1, 128>}, {pipeline_mode = #tpu.pipeline_mode<synchronous>, transform_indices = @transform_13, window_bounds = array<i64: 8, 8, 128>}]} {
    %c0 = arith.constant 0 : index
    %c0_0 = arith.constant 0 : index
    %c0_1 = arith.constant 0 : index
    %0 = vector.load %arg1[%c0, %c0_0, %c0_1] : memref<8x8x32xf32, #tpu.memory_space<vmem>>, vector<8x8x32xf32>
    %1 = vector.shape_cast %0 : vector<8x8x32xf32> to vector<64x32xf32>
    %c0_2 = arith.constant 0 : index
    %c0_3 = arith.constant 0 : index
    %2 = vector.load %arg2[%c0_2, %c0_3] : memref<32x32xf32, #tpu.memory_space<vmem>>, vector<32x32xf32>
    %cst = arith.constant dense<0.000000e+00> : vector<64x32xf32>
    %3 = tpu.matmul %1, %2, %cst {dimension_numbers = #tpu.dot_dimension_numbers<[1], [0], [0], [1], [0, 0, 1, 1], [], []>} : vector<64x32xf32>, vector<32x32xf32>, vector<64x32xf32> -> vector<64x32xf32>
    %c0_4 = arith.constant 0 : index
    %c0_5 = arith.constant 0 : index
    %4 = vector.load %arg3[%c0_4, %c0_5] : memref<1x32xf32, #tpu.memory_space<vmem>>, vector<1x32xf32>
    %5 = vector.broadcast %4 : vector<1x32xf32> to vector<64x32xf32>
    %6 = arith.addf %3, %5 : vector<64x32xf32>
    %7 = vector.shape_cast %6 : vector<64x32xf32> to vector<8x8x32xf32>
    %c0_6 = arith.constant 0 : index
    %c0_7 = arith.constant 0 : index
    %8 = vector.load %arg4[%c0_6, %c0_7] : memref<32x32xf32, #tpu.memory_space<vmem>>, vector<32x32xf32>
    %cst_8 = arith.constant dense<0.000000e+00> : vector<64x32xf32>
    %9 = tpu.matmul %1, %8, %cst_8 {dimension_numbers = #tpu.dot_dimension_numbers<[1], [0], [0], [1], [0, 0, 1, 1], [], []>} : vector<64x32xf32>, vector<32x32xf32>, vector<64x32xf32> -> vector<64x32xf32>
    %c0_9 = arith.constant 0 : index
    %c0_10 = arith.constant 0 : index
    %10 = vector.load %arg5[%c0_9, %c0_10] : memref<1x32xf32, #tpu.memory_space<vmem>>, vector<1x32xf32>
    %11 = vector.broadcast %10 : vector<1x32xf32> to vector<64x32xf32>
    %12 = arith.addf %9, %11 : vector<64x32xf32>
    %13 = vector.shape_cast %12 : vector<64x32xf32> to vector<8x8x32xf32>
    %c0_11 = arith.constant 0 : index
    %c0_12 = arith.constant 0 : index
    %14 = vector.load %arg6[%c0_11, %c0_12] : memref<32x32xf32, #tpu.memory_space<vmem>>, vector<32x32xf32>
    %cst_13 = arith.constant dense<0.000000e+00> : vector<64x32xf32>
    %15 = tpu.matmul %1, %14, %cst_13 {dimension_numbers = #tpu.dot_dimension_numbers<[1], [0], [0], [1], [0, 0, 1, 1], [], []>} : vector<64x32xf32>, vector<32x32xf32>, vector<64x32xf32> -> vector<64x32xf32>
    %c0_14 = arith.constant 0 : index
    %c0_15 = arith.constant 0 : index
    %16 = vector.load %arg7[%c0_14, %c0_15] : memref<1x32xf32, #tpu.memory_space<vmem>>, vector<1x32xf32>
    %17 = vector.broadcast %16 : vector<1x32xf32> to vector<64x32xf32>
    %18 = arith.addf %15, %17 : vector<64x32xf32>
    %19 = vector.shape_cast %18 : vector<64x32xf32> to vector<8x8x32xf32>
    "tpu.trace_start"() <{level = 10 : i32, message = "bqd,bkd->bqk"}> : () -> ()
    %cst_16 = arith.constant dense<0.000000e+00> : vector<8x8x8xf32>
    %20 = tpu.matmul %7, %13, %cst_16 {dimension_numbers = #tpu.dot_dimension_numbers<[2], [2], [1], [1], [0, 0, 0, 1, 1, 1], [0], [0]>} : vector<8x8x32xf32>, vector<8x8x32xf32>, vector<8x8x8xf32> -> vector<8x8x8xf32>
    "tpu.trace_stop"() : () -> ()
    %cst_17 = arith.constant dense<0xFF800000> : vector<8x8xf32>
    %21 = vector.multi_reduction <maximumf>, %20, %cst_17 [2] : vector<8x8x8xf32> to vector<8x8xf32>
    %22 = vector.shape_cast %21 : vector<8x8xf32> to vector<8x8x1xf32>
    %23 = vector.broadcast %22 : vector<8x8x1xf32> to vector<8x8x8xf32>
    %24 = arith.subf %20, %23 : vector<8x8x8xf32>
    %25 = math.exp %24 : vector<8x8x8xf32>
    %cst_18 = arith.constant dense<0.000000e+00> : vector<8x8xf32>
    %26 = vector.multi_reduction <add>, %25, %cst_18 [2] : vector<8x8x8xf32> to vector<8x8xf32>
    %27 = vector.shape_cast %26 : vector<8x8xf32> to vector<8x8x1xf32>
    %28 = tpu.reciprocal %27 {approx = true} : vector<8x8x1xf32> -> vector<8x8x1xf32>
    %29 = vector.broadcast %28 : vector<8x8x1xf32> to vector<8x8x8xf32>
    %30 = arith.mulf %25, %29 : vector<8x8x8xf32>
    "tpu.trace_start"() <{level = 10 : i32, message = "bqk,bkd->bqd"}> : () -> ()
    %cst_19 = arith.constant dense<0.000000e+00> : vector<8x8x32xf32>
    %31 = tpu.matmul %30, %19, %cst_19 {dimension_numbers = #tpu.dot_dimension_numbers<[2], [1], [1], [2], [0, 0, 0, 1, 1, 2], [0], [0]>} : vector<8x8x8xf32>, vector<8x8x32xf32>, vector<8x8x32xf32> -> vector<8x8x32xf32>
    "tpu.trace_stop"() : () -> ()
    %32 = vector.shape_cast %31 : vector<8x8x32xf32> to vector<64x32xf32>
    %c0_20 = arith.constant 0 : index
    %c0_21 = arith.constant 0 : index
    %33 = vector.load %arg8[%c0_20, %c0_21] : memref<32x128xf32, #tpu.memory_space<vmem>>, vector<32x128xf32>
    %cst_22 = arith.constant dense<0.000000e+00> : vector<64x128xf32>
    %34 = tpu.matmul %32, %33, %cst_22 {dimension_numbers = #tpu.dot_dimension_numbers<[1], [0], [0], [1], [0, 0, 1, 1], [], []>} : vector<64x32xf32>, vector<32x128xf32>, vector<64x128xf32> -> vector<64x128xf32>
    %c0_23 = arith.constant 0 : index
    %c0_24 = arith.constant 0 : index
    %35 = vector.load %arg9[%c0_23, %c0_24] : memref<1x128xf32, #tpu.memory_space<vmem>>, vector<1x128xf32>
    %36 = vector.broadcast %35 : vector<1x128xf32> to vector<64x128xf32>
    %37 = arith.addf %34, %36 : vector<64x128xf32>
    %cst_25 = arith.constant 0.000000e+00 : f32
    %38 = vector.broadcast %cst_25 : f32 to vector<64x128xf32>
    %39 = arith.cmpf oge, %37, %38 : vector<64x128xf32>
    %cst_26 = arith.constant 0.00999999977 : f32
    %40 = vector.broadcast %cst_26 : f32 to vector<64x128xf32>
    %41 = arith.mulf %40, %37 : vector<64x128xf32>
    %42 = arith.select %39, %37, %41 : vector<64x128xi1>, vector<64x128xf32>
    %c0_27 = arith.constant 0 : index
    %c0_28 = arith.constant 0 : index
    %43 = vector.load %arg10[%c0_27, %c0_28] : memref<128x128xf32, #tpu.memory_space<vmem>>, vector<128x128xf32>
    %cst_29 = arith.constant dense<0.000000e+00> : vector<64x128xf32>
    %44 = tpu.matmul %42, %43, %cst_29 {dimension_numbers = #tpu.dot_dimension_numbers<[1], [0], [0], [1], [0, 0, 1, 1], [], []>} : vector<64x128xf32>, vector<128x128xf32>, vector<64x128xf32> -> vector<64x128xf32>
    %c0_30 = arith.constant 0 : index
    %c0_31 = arith.constant 0 : index
    %45 = vector.load %arg11[%c0_30, %c0_31] : memref<1x128xf32, #tpu.memory_space<vmem>>, vector<1x128xf32>
    %46 = vector.broadcast %45 : vector<1x128xf32> to vector<64x128xf32>
    %47 = arith.addf %44, %46 : vector<64x128xf32>
    %cst_32 = arith.constant 0.000000e+00 : f32
    %48 = vector.broadcast %cst_32 : f32 to vector<64x128xf32>
    %49 = arith.cmpf oge, %47, %48 : vector<64x128xf32>
    %cst_33 = arith.constant 0.00999999977 : f32
    %50 = vector.broadcast %cst_33 : f32 to vector<64x128xf32>
    %51 = arith.mulf %50, %47 : vector<64x128xf32>
    %52 = arith.select %49, %47, %51 : vector<64x128xi1>, vector<64x128xf32>
    %c0_34 = arith.constant 0 : index
    %c0_35 = arith.constant 0 : index
    %53 = vector.load %arg12[%c0_34, %c0_35] : memref<128x128xf32, #tpu.memory_space<vmem>>, vector<128x128xf32>
    %cst_36 = arith.constant dense<0.000000e+00> : vector<64x128xf32>
    %54 = tpu.matmul %52, %53, %cst_36 {dimension_numbers = #tpu.dot_dimension_numbers<[1], [0], [0], [1], [0, 0, 1, 1], [], []>} : vector<64x128xf32>, vector<128x128xf32>, vector<64x128xf32> -> vector<64x128xf32>
    %c0_37 = arith.constant 0 : index
    %c0_38 = arith.constant 0 : index
    %55 = vector.load %arg13[%c0_37, %c0_38] : memref<1x128xf32, #tpu.memory_space<vmem>>, vector<1x128xf32>
    %56 = vector.broadcast %55 : vector<1x128xf32> to vector<64x128xf32>
    %57 = arith.addf %54, %56 : vector<64x128xf32>
    %cst_39 = arith.constant dense<0xFF800000> : vector<64xf32>
    %58 = vector.multi_reduction <maximumf>, %57, %cst_39 [1] : vector<64x128xf32> to vector<64xf32>
    %59 = vector.shape_cast %58 : vector<64xf32> to vector<64x1xf32>
    %60 = vector.broadcast %59 : vector<64x1xf32> to vector<64x128xf32>
    %61 = arith.subf %57, %60 : vector<64x128xf32>
    %62 = math.exp %61 : vector<64x128xf32>
    %cst_40 = arith.constant dense<0.000000e+00> : vector<64xf32>
    %63 = vector.multi_reduction <add>, %62, %cst_40 [1] : vector<64x128xf32> to vector<64xf32>
    %64 = vector.shape_cast %63 : vector<64xf32> to vector<64x1xf32>
    %65 = vector.broadcast %64 : vector<64x1xf32> to vector<64x128xf32>
    %66 = arith.divf %62, %65 : vector<64x128xf32>
    %67 = vector.shape_cast %66 : vector<64x128xf32> to vector<8x8x128xf32>
    %c0_41 = arith.constant 0 : index
    %c0_42 = arith.constant 0 : index
    %c0_43 = arith.constant 0 : index
    %68 = vector.load %arg14[%c0_41, %c0_42, %c0_43] : memref<8x8x128xf32, #tpu.memory_space<vmem>>, vector<8x8x128xf32>
    tpu.vector_store %arg14[%c0_41, %c0_42, %c0_43], %67 {strides = array<i32>} : memref<8x8x128xf32, #tpu.memory_space<vmem>>, vector<8x8x128xf32>,
    return
  }
  func.func @transform_0(%arg0: i32) -> (i32, i32, i32) {
    %c0_i32 = arith.constant 0 : i32
    %c0_i32_0 = arith.constant 0 : i32
    %c0_i32_1 = arith.constant 0 : i32
    %c0_i32_2 = arith.constant 0 : i32
    return %c0_i32, %c0_i32_0, %c0_i32_1 : i32, i32, i32
  }
  func.func @transform_1(%arg0: i32) -> (i32, i32) {
    %c0_i32 = arith.constant 0 : i32
    %c0_i32_0 = arith.constant 0 : i32
    %c0_i32_1 = arith.constant 0 : i32
    return %c0_i32, %c0_i32_0 : i32, i32
  }
  func.func @transform_2(%arg0: i32) -> (i32, i32) {
    %c0_i32 = arith.constant 0 : i32
    %c0_i32_0 = arith.constant 0 : i32
    %c0_i32_1 = arith.constant 0 : i32
    return %c0_i32, %c0_i32_0 : i32, i32
  }
  func.func @transform_3(%arg0: i32) -> (i32, i32) {
    %c0_i32 = arith.constant 0 : i32
    %c0_i32_0 = arith.constant 0 : i32
    %c0_i32_1 = arith.constant 0 : i32
    return %c0_i32, %c0_i32_0 : i32, i32
  }
  func.func @transform_4(%arg0: i32) -> (i32, i32) {
    %c0_i32 = arith.constant 0 : i32
    %c0_i32_0 = arith.constant 0 : i32
    %c0_i32_1 = arith.constant 0 : i32
    return %c0_i32, %c0_i32_0 : i32, i32
  }
  func.func @transform_5(%arg0: i32) -> (i32, i32) {
    %c0_i32 = arith.constant 0 : i32
    %c0_i32_0 = arith.constant 0 : i32
    %c0_i32_1 = arith.constant 0 : i32
    return %c0_i32, %c0_i32_0 : i32, i32
  }
  func.func @transform_6(%arg0: i32) -> (i32, i32) {
    %c0_i32 = arith.constant 0 : i32
    %c0_i32_0 = arith.constant 0 : i32
    %c0_i32_1 = arith.constant 0 : i32
    return %c0_i32, %c0_i32_0 : i32, i32
  }
  func.func @transform_7(%arg0: i32) -> (i32, i32) {
    %c0_i32 = arith.constant 0 : i32
    %c0_i32_0 = arith.constant 0 : i32
    %c0_i32_1 = arith.constant 0 : i32
    return %c0_i32, %c0_i32_0 : i32, i32
  }
  func.func @transform_8(%arg0: i32) -> (i32, i32) {
    %c0_i32 = arith.constant 0 : i32
    %c0_i32_0 = arith.constant 0 : i32
    %c0_i32_1 = arith.constant 0 : i32
    return %c0_i32, %c0_i32_0 : i32, i32
  }
  func.func @transform_9(%arg0: i32) -> (i32, i32) {
    %c0_i32 = arith.constant 0 : i32
    %c0_i32_0 = arith.constant 0 : i32
    %c0_i32_1 = arith.constant 0 : i32
    return %c0_i32, %c0_i32_0 : i32, i32
  }
  func.func @transform_10(%arg0: i32) -> (i32, i32) {
    %c0_i32 = arith.constant 0 : i32
    %c0_i32_0 = arith.constant 0 : i32
    %c0_i32_1 = arith.constant 0 : i32
    return %c0_i32, %c0_i32_0 : i32, i32
  }
  func.func @transform_11(%arg0: i32) -> (i32, i32) {
    %c0_i32 = arith.constant 0 : i32
    %c0_i32_0 = arith.constant 0 : i32
    %c0_i32_1 = arith.constant 0 : i32
    return %c0_i32, %c0_i32_0 : i32, i32
  }
  func.func @transform_12(%arg0: i32) -> (i32, i32) {
    %c0_i32 = arith.constant 0 : i32
    %c0_i32_0 = arith.constant 0 : i32
    %c0_i32_1 = arith.constant 0 : i32
    return %c0_i32, %c0_i32_0 : i32, i32
  }
  func.func @transform_13(%arg0: i32) -> (i32, i32, i32) {
    %c0_i32 = arith.constant 0 : i32
    %c0_i32_0 = arith.constant 0 : i32
    %c0_i32_1 = arith.constant 0 : i32
    %c0_i32_2 = arith.constant 0 : i32
    return %c0_i32, %c0_i32_0, %c0_i32_1 : i32, i32, i32
  }
}

</mosaic_0001>

<llo_original>
// kernel: tpu_custom_call.1
$region0: #{tpu_custom_call.1}
  #allocation0 [shape = 'u32[]', space=smem, size = 0x4, offset = 0x4, fixed_abs, tag = 'smem constant byte address 0x4 - core index']
  #allocation1 [shape = 'u32[144,128]{1,0:T(1,128)}', space=vmem, size = 0x12000, scoped, tag = 'internal scratch']
  %s0 = inlined_call_operand.hbm [shape: f32[8,8,32], index: 0, kind: input, shape index: {}]
  %s1 = inlined_call_operand.hbm [shape: f32[32,32], index: 1, kind: input, shape index: {}]
  %s2 = inlined_call_operand.vmem [shape: f32[1,32], index: 2, kind: input, shape index: {}]
  %s3 = inlined_call_operand.hbm [shape: f32[32,32], index: 3, kind: input, shape index: {}]
  %s4 = inlined_call_operand.vmem [shape: f32[1,32], index: 4, kind: input, shape index: {}]
  %s5 = inlined_call_operand.hbm [shape: f32[32,32], index: 5, kind: input, shape index: {}]
  %s6 = inlined_call_operand.vmem [shape: f32[1,32], index: 6, kind: input, shape index: {}]
  %s7 = inlined_call_operand.hbm [shape: f32[32,128], index: 7, kind: input, shape index: {}]
  %s8 = inlined_call_operand.vmem [shape: f32[1,128], index: 8, kind: input, shape index: {}]
  %s9 = inlined_call_operand.hbm [shape: f32[128,128], index: 9, kind: input, shape index: {}]
  %s10 = inlined_call_operand.vmem [shape: f32[1,128], index: 10, kind: input, shape index: {}]
  %s11 = inlined_call_operand.hbm [shape: f32[128,128], index: 11, kind: input, shape index: {}]
  %s12 = inlined_call_operand.vmem [shape: f32[1,128], index: 12, kind: input, shape index: {}]
  %s13 = inlined_call_operand.hbm [shape: f32[8,8,128], index: 13, kind: output, shape index: {}]
  %s14 = sld [smem:[#allocation0]]
  $region90: #{tpu_custom_call.1} parent=0
    _
  %s16 = ssub.s32 1, %s14
  %s17 = scalar_select 0, %s16, %s14
  $region1: #{tpu_custom_call.1} parent=0
    #allocation2 [shape = 'u8[32768]{0}', space=vmem, size = 0x8000, scoped, tag = 'input window, operand 0, single buffered']
    #allocation3 [shape = 's32[1]{0}', space=sflag, size = 0x4, scoped, tag = 'scoped memory for tpu_custom_call.1']
    #allocation4 [shape = 's32[1]{0}', space=sflag, size = 0x4, scoped, tag = 'scoped memory for tpu_custom_call.1']
    #allocation5 [shape = 'u8[16384]{0}', space=vmem, size = 0x4000, scoped, tag = 'input window, operand 1, single buffered']
    #allocation6 [shape = 's32[1]{0}', space=sflag, size = 0x4, scoped, tag = 'scoped memory for tpu_custom_call.1']
    #allocation7 [shape = 'u8[16384]{0}', space=vmem, size = 0x4000, scoped, tag = 'input window, operand 3, single buffered']
    #allocation8 [shape = 'u8[16384]{0}', space=vmem, size = 0x4000, scoped, tag = 'input window, operand 5, single buffered']
    #allocation9 [shape = 's32[1]{0}', space=sflag, size = 0x4, scoped, tag = 'scoped memory for tpu_custom_call.1']
    #allocation10 [shape = 'u8[16384]{0}', space=vmem, size = 0x4000, scoped, tag = 'input window, operand 7, single buffered']
    #allocation11 [shape = 'u8[65536]{0}', space=vmem, size = 0x10000, scoped, tag = 'input window, operand 9, single buffered']
    #allocation12 [shape = 's32[1]{0}', space=sflag, size = 0x4, scoped, tag = 'scoped memory for tpu_custom_call.1']
    #allocation13 [shape = 'u8[65536]{0}', space=vmem, size = 0x10000, scoped, tag = 'input window, operand 11, single buffered']
    #allocation14 [shape = 'u8[32768]{0}', space=vmem, size = 0x8000, scoped, tag = 'output window, operand 0, single buffered']
    %18 = vsyncpa [#allocation3], 0
    %19 = vsyncpa [#allocation6], 0
    %20 = vsyncpa [#allocation9], 0
    %21 = vsyncpa [#allocation12], 0
    %22 = vsyncpa [#allocation4], 0
    // Predicated region
    $region2: #{tpu_custom_call.1} parent=1 // pred_check
      _
    $region3: #{tpu_custom_call.1} parent=1 // pred_check_branch
      %24 = sbr.rel (0) target = $region5
    $region4: #{tpu_custom_call.1} parent=1 // pred_region
      %s26 = ssub.s32 1024, 1024
      %27 = vsyncadd [#allocation3], %s26
      %s28 = sshll.u32 [#allocation2], 4
      %s29 = int_to_ptr.vmem [resolvable:$true] %s28
      %34 = dma.hbm_to_vmem [thread:$0]  %s0, 1024, %s29, [#allocation3], 128, 128, 8
    $region5: #{tpu_custom_call.1} parent=1 // pred_fallthru
      _
    // Predicated region
    $region6: #{tpu_custom_call.1} parent=1 // pred_check
      _
    $region7: #{tpu_custom_call.1} parent=1 // pred_check_branch
      %36 = sbr.rel (0) target = $region9
    $region8: #{tpu_custom_call.1} parent=1 // pred_region
      %s38 = ssub.s32 512, 512
      %39 = vsyncadd [#allocation6], %s38
      %s40 = sshll.u32 [#allocation5], 4
      %s41 = int_to_ptr.vmem [resolvable:$true] %s40
      %46 = dma.hbm_to_vmem [thread:$0]  %s1, 512, %s41, [#allocation6], 128, 128, 8
    $region9: #{tpu_custom_call.1} parent=1 // pred_fallthru
      _
    // Predicated region
    $region10: #{tpu_custom_call.1} parent=1 // pred_check
      _
    $region11: #{tpu_custom_call.1} parent=1 // pred_check_branch
      %48 = sbr.rel (0) target = $region13
    $region12: #{tpu_custom_call.1} parent=1 // pred_region
      _
    $region13: #{tpu_custom_call.1} parent=1 // pred_fallthru
      _
    // Predicated region
    $region14: #{tpu_custom_call.1} parent=1 // pred_check
      _
    $region15: #{tpu_custom_call.1} parent=1 // pred_check_branch
      %50 = sbr.rel (0) target = $region17
    $region16: #{tpu_custom_call.1} parent=1 // pred_region
      %s52 = ssub.s32 512, 512
      %53 = vsyncadd [#allocation6], %s52
      %s54 = sshll.u32 [#allocation7], 4
      %s55 = int_to_ptr.vmem [resolvable:$true] %s54
      %60 = dma.hbm_to_vmem [thread:$0]  %s3, 512, %s55, [#allocation6], 128, 128, 8
    $region17: #{tpu_custom_call.1} parent=1 // pred_fallthru
      _
    // Predicated region
    $region18: #{tpu_custom_call.1} parent=1 // pred_check
      _
    $region19: #{tpu_custom_call.1} parent=1 // pred_check_branch
      %62 = sbr.rel (0) target = $region21
    $region20: #{tpu_custom_call.1} parent=1 // pred_region
      _
    $region21: #{tpu_custom_call.1} parent=1 // pred_fallthru
      _
    // Predicated region
    $region22: #{tpu_custom_call.1} parent=1 // pred_check
      _
    $region23: #{tpu_custom_call.1} parent=1 // pred_check_branch
      %64 = sbr.rel (0) target = $region25
    $region24: #{tpu_custom_call.1} parent=1 // pred_region
      %s66 = ssub.s32 512, 512
      %67 = vsyncadd [#allocation9], %s66
      %s68 = sshll.u32 [#allocation8], 4
      %s69 = int_to_ptr.vmem [resolvable:$true] %s68
      %74 = dma.hbm_to_vmem [thread:$0]  %s5, 512, %s69, [#allocation9], 128, 128, 8
    $region25: #{tpu_custom_call.1} parent=1 // pred_fallthru
      _
    // Predicated region
    $region26: #{tpu_custom_call.1} parent=1 // pred_check
      _
    $region27: #{tpu_custom_call.1} parent=1 // pred_check_branch
      %76 = sbr.rel (0) target = $region29
    $region28: #{tpu_custom_call.1} parent=1 // pred_region
      _
    $region29: #{tpu_custom_call.1} parent=1 // pred_fallthru
      _
    // Predicated region
    $region30: #{tpu_custom_call.1} parent=1 // pred_check
      _
    $region31: #{tpu_custom_call.1} parent=1 // pred_check_branch
      %78 = sbr.rel (0) target = $region33
    $region32: #{tpu_custom_call.1} parent=1 // pred_region
      %s80 = ssub.s32 512, 512
      %81 = vsyncadd [#allocation9], %s80
      %s82 = sshll.u32 [#allocation10], 4
      %s83 = int_to_ptr.vmem [resolvable:$true] %s82
      %88 = dma.hbm_to_vmem [thread:$0]  %s7, 512, %s83, [#allocation9], 128, 128, 8
    $region33: #{tpu_custom_call.1} parent=1 // pred_fallthru
      _
    // Predicated region
    $region34: #{tpu_custom_call.1} parent=1 // pred_check
      _
    $region35: #{tpu_custom_call.1} parent=1 // pred_check_branch
      %90 = sbr.rel (0) target = $region37
    $region36: #{tpu_custom_call.1} parent=1 // pred_region
      _
    $region37: #{tpu_custom_call.1} parent=1 // pred_fallthru
      _
    // Predicated region
    $region38: #{tpu_custom_call.1} parent=1 // pred_check
      _
    $region39: #{tpu_custom_call.1} parent=1 // pred_check_branch
      %92 = sbr.rel (0) target = $region41
    $region40: #{tpu_custom_call.1} parent=1 // pred_region
      %s94 = ssub.s32 2048, 2048
      %95 = vsyncadd [#allocation12], %s94
      %s96 = sshll.u32 [#allocation11], 4
      %s97 = int_to_ptr.vmem [resolvable:$true] %s96
      %102 = dma.hbm_to_vmem [thread:$0]  %s9, 2048, %s97, [#allocation12], 128, 128, 8
    $region41: #{tpu_custom_call.1} parent=1 // pred_fallthru
      _
    // Predicated region
    $region42: #{tpu_custom_call.1} parent=1 // pred_check
      _
    $region43: #{tpu_custom_call.1} parent=1 // pred_check_branch
      %104 = sbr.rel (0) target = $region45
    $region44: #{tpu_custom_call.1} parent=1 // pred_region
      _
    $region45: #{tpu_custom_call.1} parent=1 // pred_fallthru
      _
    // Predicated region
    $region46: #{tpu_custom_call.1} parent=1 // pred_check
      _
    $region47: #{tpu_custom_call.1} parent=1 // pred_check_branch
      %106 = sbr.rel (0) target = $region49
    $region48: #{tpu_custom_call.1} parent=1 // pred_region
      %s108 = ssub.s32 2048, 2048
      %109 = vsyncadd [#allocation12], %s108
      %s110 = sshll.u32 [#allocation13], 4
      %s111 = int_to_ptr.vmem [resolvable:$true] %s110
      %116 = dma.hbm_to_vmem [thread:$0]  %s11, 2048, %s111, [#allocation12], 128, 128, 8
    $region49: #{tpu_custom_call.1} parent=1 // pred_fallthru
      _
    // Predicated region
    $region50: #{tpu_custom_call.1} parent=1 // pred_check
      _
    $region51: #{tpu_custom_call.1} parent=1 // pred_check_branch
      %118 = sbr.rel (0) target = $region53
    $region52: #{tpu_custom_call.1} parent=1 // pred_region
      _
    $region53: #{tpu_custom_call.1} parent=1 // pred_fallthru
      _
    // Predicated region
    $region54: #{tpu_custom_call.1} parent=1 // pred_check
      _
    $region55: #{tpu_custom_call.1} parent=1 // pred_check_branch
      %120 = sbr.rel (0) target = $region57
    $region56: #{tpu_custom_call.1} parent=1 // pred_region
      %121 = dma.done [#allocation3], 1024
    $region57: #{tpu_custom_call.1} parent=1 // pred_fallthru
      _
    // Predicated region
    $region58: #{tpu_custom_call.1} parent=1 // pred_check
      _
    $region59: #{tpu_custom_call.1} parent=1 // pred_check_branch
      %123 = sbr.rel (0) target = $region61
    $region60: #{tpu_custom_call.1} parent=1 // pred_region
      %124 = dma.done [#allocation6], 512
    $region61: #{tpu_custom_call.1} parent=1 // pred_fallthru
      _
    // Predicated region
    $region62: #{tpu_custom_call.1} parent=1 // pred_check
      _
    $region63: #{tpu_custom_call.1} parent=1 // pred_check_branch
      %126 = sbr.rel (0) target = $region65
    $region64: #{tpu_custom_call.1} parent=1 // pred_region
      %127 = dma.done [#allocation6], 512
    $region65: #{tpu_custom_call.1} parent=1 // pred_fallthru
      _
    // Predicated region
    $region66: #{tpu_custom_call.1} parent=1 // pred_check
      _
    $region67: #{tpu_custom_call.1} parent=1 // pred_check_branch
      %129 = sbr.rel (0) target = $region69
    $region68: #{tpu_custom_call.1} parent=1 // pred_region
      %130 = dma.done [#allocation9], 512
    $region69: #{tpu_custom_call.1} parent=1 // pred_fallthru
      _
    // Predicated region
    $region70: #{tpu_custom_call.1} parent=1 // pred_check
      _
    $region71: #{tpu_custom_call.1} parent=1 // pred_check_branch
      %132 = sbr.rel (0) target = $region73
    $region72: #{tpu_custom_call.1} parent=1 // pred_region
      %133 = dma.done [#allocation9], 512
    $region73: #{tpu_custom_call.1} parent=1 // pred_fallthru
      _
    // Predicated region
    $region74: #{tpu_custom_call.1} parent=1 // pred_check
      _
    $region75: #{tpu_custom_call.1} parent=1 // pred_check_branch
      %135 = sbr.rel (0) target = $region77
    $region76: #{tpu_custom_call.1} parent=1 // pred_region
      %136 = dma.done [#allocation12], 2048
    $region77: #{tpu_custom_call.1} parent=1 // pred_fallthru
      _
    // Predicated region
    $region78: #{tpu_custom_call.1} parent=1 // pred_check
      _
    $region79: #{tpu_custom_call.1} parent=1 // pred_check_branch
      %138 = sbr.rel (0) target = $region81
    $region80: #{tpu_custom_call.1} parent=1 // pred_region
      %139 = dma.done [#allocation12], 2048
    $region81: #{tpu_custom_call.1} parent=1 // pred_fallthru
      _
    %v140 = vld [vmem:[#allocation2] sm:$0xff]
    %v141 = vld [vmem:[#allocation2 + $0x8] sm:$0xff]
    %v142 = vld [vmem:[#allocation2 + $0x10] sm:$0xff]
    %v143 = vld [vmem:[#allocation2 + $0x18] sm:$0xff]
    %v144 = vld [vmem:[#allocation2 + $0x20] sm:$0xff]
    %v145 = vld [vmem:[#allocation2 + $0x28] sm:$0xff]
    %v146 = vld [vmem:[#allocation2 + $0x30] sm:$0xff]
    %v147 = vld [vmem:[#allocation2 + $0x38] sm:$0xff]
    %v148 = vld [vmem:[#allocation5] sm:$0xff]
    %v149 = vld [vmem:[#allocation5 + $0x8] sm:$0xff]
    %v150 = vld [vmem:[#allocation5 + $0x10] sm:$0xff]
    %v151 = vld [vmem:[#allocation5 + $0x18] sm:$0xff]
    %v152 = vld [vmem:[%s2] sm:$0x1]
    %v154 = vlaneseq
    %v155 = vshrl.u32 %v154, 7
    %v156 = vsub.s32 0, %v155
    %v157 = vrot.slane %v152, %v156
    %vm159 = vcmask 261120
    %v161 = vsel %vm159, %v140, 0
    %v164 = vsel %vm159, %v141, 0
    %v167 = vsel %vm159, %v142, 0
    %v170 = vsel %vm159, %v143, 0
    %v173 = vsel %vm159, %v144, 0
    %v176 = vsel %vm159, %v145, 0
    %v179 = vsel %vm159, %v146, 0
    %v182 = vsel %vm159, %v147, 0
    %184 = vmatprep.subr.mxu0 0.0
    %185 = vmatpush1.msra.mxu0 0.0
    %186 = vmatprep.subr.mxu0 0.0
    %187 = vmatpush1.msra.mxu0 0.0
    %188 = vmatprep.subr.mxu0 0.0
    %189 = vmatpush1.msra.mxu0 0.0
    %190 = vmatprep.subr.mxu0 0.0
    %191 = vmatpush1.msra.mxu0 0.0
    %192 = vmatprep.subr.mxu0 0.0
    %193 = vmatpush1.msra.mxu0 0.0
    %194 = vmatprep.subr.mxu0 0.0
    %195 = vmatpush1.msra.mxu0 0.0
    %196 = vmatprep.subr.mxu0 0.0
    %197 = vmatpush1.msra.mxu0 0.0
    %198 = vmatprep.subr.mxu0 0.0
    %199 = vmatpush1.msra.mxu0 0.0
    %200 = vmatprep.subr.mxu0 0.0
    %201 = vmatpush1.msra.mxu0 0.0
    %202 = vmatprep.subr.mxu0 0.0
    %203 = vmatpush1.msra.mxu0 0.0
    %204 = vmatprep.subr.mxu0 0.0
    %205 = vmatpush1.msra.mxu0 0.0
    %206 = vmatprep.subr.mxu0 0.0
    %207 = vmatpush1.msra.mxu0 0.0
    %208 = vmatprep.subr.mxu0 0.0
    %209 = vmatpush1.msra.mxu0 %v151
    %210 = vmatprep.subr.mxu0 0.0
    %211 = vmatpush1.msra.mxu0 %v150
    %212 = vmatprep.subr.mxu0 0.0
    %213 = vmatpush1.msra.mxu0 %v149
    %214 = vmatprep.subr.mxu0 0.0
    %215 = vmatpush1.msra.mxu0 %v148
    %216 = vmatprep.subr.mxu0 0.0
    %217 = vmatpush2.msra.mxu0 0.0
    %218 = vmatprep.subr.mxu0 0.0
    %219 = vmatpush2.msra.mxu0 0.0
    %220 = vmatprep.subr.mxu0 0.0
    %221 = vmatpush2.msra.mxu0 0.0
    %222 = vmatprep.subr.mxu0 0.0
    %223 = vmatpush2.msra.mxu0 0.0
    %224 = vmatprep.subr.mxu0 0.0
    %225 = vmatpush2.msra.mxu0 0.0
    %226 = vmatprep.subr.mxu0 0.0
    %227 = vmatpush2.msra.mxu0 0.0
    %228 = vmatprep.subr.mxu0 0.0
    %229 = vmatpush2.msra.mxu0 0.0
    %230 = vmatprep.subr.mxu0 0.0
    %231 = vmatpush2.msra.mxu0 0.0
    %232 = vmatprep.subr.mxu0 0.0
    %233 = vmatpush2.msra.mxu0 0.0
    %234 = vmatprep.subr.mxu0 0.0
    %235 = vmatpush2.msra.mxu0 0.0
    %236 = vmatprep.subr.mxu0 0.0
    %237 = vmatpush2.msra.mxu0 0.0
    %238 = vmatprep.subr.mxu0 0.0
    %239 = vmatpush2.msra.mxu0 0.0
    %240 = vmatprep.subr.mxu0 0.0
    %241 = vmatpush2.msra.mxu0 0.0
    %242 = vmatprep.subr.mxu0 0.0
    %243 = vmatpush2.msra.mxu0 0.0
    %244 = vmatprep.subr.mxu0 0.0
    %245 = vmatpush2.msra.mxu0 0.0
    %246 = vmatprep.subr.mxu0 0.0
    %247 = vmatpush2.msra.mxu0 0.0
    %248 = vmatprep.mubr.f32.mxu0 0.0
    %249 = vmatmul.mubr.f32.gmra.mxu0 %v161
    %v250 = vpop.f32.mrf.mxu0
    %v251 = vadd.f32 %v157, %v250
    %v252 = vpop.f32.mrf.mxu0
    %253 = vmatprep.mubr.f32.mxu0 0.0
    %254 = vmatmul.mubr.f32.gmra.mxu0 %v164
    %v255 = vpop.f32.mrf.mxu0
    %v256 = vadd.f32 %v157, %v255
    %v257 = vpop.f32.mrf.mxu0
    %258 = vmatprep.mubr.f32.mxu0 0.0
    %259 = vmatmul.mubr.f32.gmra.mxu0 %v167
    %v260 = vpop.f32.mrf.mxu0
    %v261 = vadd.f32 %v157, %v260
    %v262 = vpop.f32.mrf.mxu0
    %263 = vmatprep.mubr.f32.mxu0 0.0
    %264 = vmatmul.mubr.f32.gmra.mxu0 %v170
    %v265 = vpop.f32.mrf.mxu0
    %v266 = vadd.f32 %v157, %v265
    %v267 = vpop.f32.mrf.mxu0
    %268 = vmatprep.mubr.f32.mxu0 0.0
    %269 = vmatmul.mubr.f32.gmra.mxu0 %v173
    %v270 = vpop.f32.mrf.mxu0
    %v271 = vadd.f32 %v157, %v270
    %v272 = vpop.f32.mrf.mxu0
    %273 = vmatprep.mubr.f32.mxu0 0.0
    %274 = vmatmul.mubr.f32.gmra.mxu0 %v176
    %v275 = vpop.f32.mrf.mxu0
    %v276 = vadd.f32 %v157, %v275
    %v277 = vpop.f32.mrf.mxu0
    %278 = vmatprep.mubr.f32.mxu0 0.0
    %279 = vmatmul.mubr.f32.gmra.mxu0 %v179
    %v280 = vpop.f32.mrf.mxu0
    %v281 = vadd.f32 %v157, %v280
    %v282 = vpop.f32.mrf.mxu0
    %283 = vmatprep.mubr.f32.mxu0 0.0
    %284 = vmatmul.mubr.f32.gmra.mxu0 %v182
    %v285 = vpop.f32.mrf.mxu0
    %v286 = vadd.f32 %v157, %v285
    %v287 = vpop.f32.mrf.mxu0
    %288 = vdwg.mxu0
    %v289 = vld [vmem:[#allocation7] sm:$0xff]
    %v290 = vld [vmem:[#allocation7 + $0x8] sm:$0xff]
    %v291 = vld [vmem:[#allocation7 + $0x10] sm:$0xff]
    %v292 = vld [vmem:[#allocation7 + $0x18] sm:$0xff]
    %v293 = vld [vmem:[%s4] sm:$0x1]
    %v295 = vlaneseq
    %v296 = vshrl.u32 %v295, 7
    %v297 = vsub.s32 0, %v296
    %v298 = vrot.slane %v293, %v297
    %300 = vmatprep.subr.mxu0 0.0
    %301 = vmatpush1.msra.mxu0 0.0
    %302 = vmatprep.subr.mxu0 0.0
    %303 = vmatpush1.msra.mxu0 0.0
    %304 = vmatprep.subr.mxu0 0.0
    %305 = vmatpush1.msra.mxu0 0.0
    %306 = vmatprep.subr.mxu0 0.0
    %307 = vmatpush1.msra.mxu0 0.0
    %308 = vmatprep.subr.mxu0 0.0
    %309 = vmatpush1.msra.mxu0 0.0
    %310 = vmatprep.subr.mxu0 0.0
    %311 = vmatpush1.msra.mxu0 0.0
    %312 = vmatprep.subr.mxu0 0.0
    %313 = vmatpush1.msra.mxu0 0.0
    %314 = vmatprep.subr.mxu0 0.0
    %315 = vmatpush1.msra.mxu0 0.0
    %316 = vmatprep.subr.mxu0 0.0
    %317 = vmatpush1.msra.mxu0 0.0
    %318 = vmatprep.subr.mxu0 0.0
    %319 = vmatpush1.msra.mxu0 0.0
    %320 = vmatprep.subr.mxu0 0.0
    %321 = vmatpush1.msra.mxu0 0.0
    %322 = vmatprep.subr.mxu0 0.0
    %323 = vmatpush1.msra.mxu0 0.0
    %324 = vmatprep.subr.mxu0 0.0
    %325 = vmatpush1.msra.mxu0 %v292
    %326 = vmatprep.subr.mxu0 0.0
    %327 = vmatpush1.msra.mxu0 %v291
    %328 = vmatprep.subr.mxu0 0.0
    %329 = vmatpush1.msra.mxu0 %v290
    %330 = vmatprep.subr.mxu0 0.0
    %331 = vmatpush1.msra.mxu0 %v289
    %332 = vmatprep.subr.mxu0 0.0
    %333 = vmatpush2.msra.mxu0 0.0
    %334 = vmatprep.subr.mxu0 0.0
    %335 = vmatpush2.msra.mxu0 0.0
    %336 = vmatprep.subr.mxu0 0.0
    %337 = vmatpush2.msra.mxu0 0.0
    %338 = vmatprep.subr.mxu0 0.0
    %339 = vmatpush2.msra.mxu0 0.0
    %340 = vmatprep.subr.mxu0 0.0
    %341 = vmatpush2.msra.mxu0 0.0
    %342 = vmatprep.subr.mxu0 0.0
    %343 = vmatpush2.msra.mxu0 0.0
    %344 = vmatprep.subr.mxu0 0.0
    %345 = vmatpush2.msra.mxu0 0.0
    %346 = vmatprep.subr.mxu0 0.0
    %347 = vmatpush2.msra.mxu0 0.0
    %348 = vmatprep.subr.mxu0 0.0
    %349 = vmatpush2.msra.mxu0 0.0
    %350 = vmatprep.subr.mxu0 0.0
    %351 = vmatpush2.msra.mxu0 0.0
    %352 = vmatprep.subr.mxu0 0.0
    %353 = vmatpush2.msra.mxu0 0.0
    %354 = vmatprep.subr.mxu0 0.0
    %355 = vmatpush2.msra.mxu0 0.0
    %356 = vmatprep.subr.mxu0 0.0
    %357 = vmatpush2.msra.mxu0 0.0
    %358 = vmatprep.subr.mxu0 0.0
    %359 = vmatpush2.msra.mxu0 0.0
    %360 = vmatprep.subr.mxu0 0.0
    %361 = vmatpush2.msra.mxu0 0.0
    %362 = vmatprep.subr.mxu0 0.0
    %363 = vmatpush2.msra.mxu0 0.0
    %364 = vmatprep.mubr.f32.mxu0 0.0
    %365 = vmatmul.mubr.f32.gmra.mxu0 %v161
    %v366 = vpop.f32.mrf.mxu0
    %v367 = vadd.f32 %v298, %v366
    %v368 = vpop.f32.mrf.mxu0
    %369 = vmatprep.mubr.f32.mxu0 0.0
    %370 = vmatmul.mubr.f32.gmra.mxu0 %v164
    %v371 = vpop.f32.mrf.mxu0
    %v372 = vadd.f32 %v298, %v371
    %v373 = vpop.f32.mrf.mxu0
    %374 = vmatprep.mubr.f32.mxu0 0.0
    %375 = vmatmul.mubr.f32.gmra.mxu0 %v167
    %v376 = vpop.f32.mrf.mxu0
    %v377 = vadd.f32 %v298, %v376
    %v378 = vpop.f32.mrf.mxu0
    %379 = vmatprep.mubr.f32.mxu0 0.0
    %380 = vmatmul.mubr.f32.gmra.mxu0 %v170
    %v381 = vpop.f32.mrf.mxu0
    %v382 = vadd.f32 %v298, %v381
    %v383 = vpop.f32.mrf.mxu0
    %384 = vmatprep.mubr.f32.mxu0 0.0
    %385 = vmatmul.mubr.f32.gmra.mxu0 %v173
    %v386 = vpop.f32.mrf.mxu0
    %v387 = vadd.f32 %v298, %v386
    %v388 = vpop.f32.mrf.mxu0
    %389 = vmatprep.mubr.f32.mxu0 0.0
    %390 = vmatmul.mubr.f32.gmra.mxu0 %v176
    %v391 = vpop.f32.mrf.mxu0
    %v392 = vadd.f32 %v298, %v391
    %v393 = vpop.f32.mrf.mxu0
    %394 = vmatprep.mubr.f32.mxu0 0.0
    %395 = vmatmul.mubr.f32.gmra.mxu0 %v179
    %v396 = vpop.f32.mrf.mxu0
    %v397 = vadd.f32 %v298, %v396
    %v398 = vpop.f32.mrf.mxu0
    %399 = vmatprep.mubr.f32.mxu0 0.0
    %400 = vmatmul.mubr.f32.gmra.mxu0 %v182
    %v401 = vpop.f32.mrf.mxu0
    %v402 = vadd.f32 %v298, %v401
    %v403 = vpop.f32.mrf.mxu0
    %404 = vdwg.mxu0
    %v405 = vld [vmem:[#allocation8] sm:$0xff]
    %v406 = vld [vmem:[#allocation8 + $0x8] sm:$0xff]
    %v407 = vld [vmem:[#allocation8 + $0x10] sm:$0xff]
    %v408 = vld [vmem:[#allocation8 + $0x18] sm:$0xff]
    %v409 = vld [vmem:[%s6] sm:$0x1]
    %v411 = vlaneseq
    %v412 = vshrl.u32 %v411, 7
    %v413 = vsub.s32 0, %v412
    %v414 = vrot.slane %v409, %v413
    %416 = vmatprep.subr.mxu0 0.0
    %417 = vmatpush1.msra.mxu0 0.0
    %418 = vmatprep.subr.mxu0 0.0
    %419 = vmatpush1.msra.mxu0 0.0
    %420 = vmatprep.subr.mxu0 0.0
    %421 = vmatpush1.msra.mxu0 0.0
    %422 = vmatprep.subr.mxu0 0.0
    %423 = vmatpush1.msra.mxu0 0.0
    %424 = vmatprep.subr.mxu0 0.0
    %425 = vmatpush1.msra.mxu0 0.0
    %426 = vmatprep.subr.mxu0 0.0
    %427 = vmatpush1.msra.mxu0 0.0
    %428 = vmatprep.subr.mxu0 0.0
    %429 = vmatpush1.msra.mxu0 0.0
    %430 = vmatprep.subr.mxu0 0.0
    %431 = vmatpush1.msra.mxu0 0.0
    %432 = vmatprep.subr.mxu0 0.0
    %433 = vmatpush1.msra.mxu0 0.0
    %434 = vmatprep.subr.mxu0 0.0
    %435 = vmatpush1.msra.mxu0 0.0
    %436 = vmatprep.subr.mxu0 0.0
    %437 = vmatpush1.msra.mxu0 0.0
    %438 = vmatprep.subr.mxu0 0.0
    %439 = vmatpush1.msra.mxu0 0.0
    %440 = vmatprep.subr.mxu0 0.0
    %441 = vmatpush1.msra.mxu0 %v408
    %442 = vmatprep.subr.mxu0 0.0
    %443 = vmatpush1.msra.mxu0 %v407
    %444 = vmatprep.subr.mxu0 0.0
    %445 = vmatpush1.msra.mxu0 %v406
    %446 = vmatprep.subr.mxu0 0.0
    %447 = vmatpush1.msra.mxu0 %v405
    %448 = vmatprep.subr.mxu0 0.0
    %449 = vmatpush2.msra.mxu0 0.0
    %450 = vmatprep.subr.mxu0 0.0
    %451 = vmatpush2.msra.mxu0 0.0
    %452 = vmatprep.subr.mxu0 0.0
    %453 = vmatpush2.msra.mxu0 0.0
    %454 = vmatprep.subr.mxu0 0.0
    %455 = vmatpush2.msra.mxu0 0.0
    %456 = vmatprep.subr.mxu0 0.0
    %457 = vmatpush2.msra.mxu0 0.0
    %458 = vmatprep.subr.mxu0 0.0
    %459 = vmatpush2.msra.mxu0 0.0
    %460 = vmatprep.subr.mxu0 0.0
    %461 = vmatpush2.msra.mxu0 0.0
    %462 = vmatprep.subr.mxu0 0.0
    %463 = vmatpush2.msra.mxu0 0.0
    %464 = vmatprep.subr.mxu0 0.0
    %465 = vmatpush2.msra.mxu0 0.0
    %466 = vmatprep.subr.mxu0 0.0
    %467 = vmatpush2.msra.mxu0 0.0
    %468 = vmatprep.subr.mxu0 0.0
    %469 = vmatpush2.msra.mxu0 0.0
    %470 = vmatprep.subr.mxu0 0.0
    %471 = vmatpush2.msra.mxu0 0.0
    %472 = vmatprep.subr.mxu0 0.0
    %473 = vmatpush2.msra.mxu0 0.0
    %474 = vmatprep.subr.mxu0 0.0
    %475 = vmatpush2.msra.mxu0 0.0
    %476 = vmatprep.subr.mxu0 0.0
    %477 = vmatpush2.msra.mxu0 0.0
    %478 = vmatprep.subr.mxu0 0.0
    %479 = vmatpush2.msra.mxu0 0.0
    %480 = vmatprep.mubr.f32.mxu0 0.0
    %481 = vmatmul.mubr.f32.gmra.mxu0 %v161
    %v482 = vpop.f32.mrf.mxu0
    %v483 = vadd.f32 %v414, %v482
    %v484 = vpop.f32.mrf.mxu0
    %485 = vmatprep.mubr.f32.mxu0 0.0
    %486 = vmatmul.mubr.f32.gmra.mxu0 %v164
    %v487 = vpop.f32.mrf.mxu0
    %v488 = vadd.f32 %v414, %v487
    %v489 = vpop.f32.mrf.mxu0
    %490 = vmatprep.mubr.f32.mxu0 0.0
    %491 = vmatmul.mubr.f32.gmra.mxu0 %v167
    %v492 = vpop.f32.mrf.mxu0
    %v493 = vadd.f32 %v414, %v492
    %v494 = vpop.f32.mrf.mxu0
    %495 = vmatprep.mubr.f32.mxu0 0.0
    %496 = vmatmul.mubr.f32.gmra.mxu0 %v170
    %v497 = vpop.f32.mrf.mxu0
    %v498 = vadd.f32 %v414, %v497
    %v499 = vpop.f32.mrf.mxu0
    %500 = vmatprep.mubr.f32.mxu0 0.0
    %501 = vmatmul.mubr.f32.gmra.mxu0 %v173
    %v502 = vpop.f32.mrf.mxu0
    %v503 = vadd.f32 %v414, %v502
    %v504 = vpop.f32.mrf.mxu0
    %505 = vmatprep.mubr.f32.mxu0 0.0
    %506 = vmatmul.mubr.f32.gmra.mxu0 %v176
    %v507 = vpop.f32.mrf.mxu0
    %v508 = vadd.f32 %v414, %v507
    %v509 = vpop.f32.mrf.mxu0
    %510 = vmatprep.mubr.f32.mxu0 0.0
    %511 = vmatmul.mubr.f32.gmra.mxu0 %v179
    %v512 = vpop.f32.mrf.mxu0
    %v513 = vadd.f32 %v414, %v512
    %v514 = vpop.f32.mrf.mxu0
    %515 = vmatprep.mubr.f32.mxu0 0.0
    %516 = vmatmul.mubr.f32.gmra.mxu0 %v182
    %v517 = vpop.f32.mrf.mxu0
    %v518 = vadd.f32 %v414, %v517
    %v519 = vpop.f32.mrf.mxu0
    %520 = vdwg.mxu0
    %v522 = vsel %vm159, %v251, 0
    %v525 = vsel %vm159, %v367, 0
    %527 = vmatprep.subr.mxu0 0.0
    %528 = vmatpush1.xpose.msra.mxu0 0.0
    %529 = vmatprep.subr.mxu0 0.0
    %530 = vmatpush1.xpose.msra.mxu0 0.0
    %531 = vmatprep.subr.mxu0 0.0
    %532 = vmatpush1.xpose.msra.mxu0 0.0
    %533 = vmatprep.subr.mxu0 0.0
    %534 = vmatpush1.xpose.msra.mxu0 0.0
    %535 = vmatprep.subr.mxu0 0.0
    %536 = vmatpush1.xpose.msra.mxu0 0.0
    %537 = vmatprep.subr.mxu0 0.0
    %538 = vmatpush1.xpose.msra.mxu0 0.0
    %539 = vmatprep.subr.mxu0 0.0
    %540 = vmatpush1.xpose.msra.mxu0 0.0
    %541 = vmatprep.subr.mxu0 0.0
    %542 = vmatpush1.xpose.msra.mxu0 0.0
    %543 = vmatprep.subr.mxu0 0.0
    %544 = vmatpush1.xpose.msra.mxu0 0.0
    %545 = vmatprep.subr.mxu0 0.0
    %546 = vmatpush1.xpose.msra.mxu0 0.0
    %547 = vmatprep.subr.mxu0 0.0
    %548 = vmatpush1.xpose.msra.mxu0 0.0
    %549 = vmatprep.subr.mxu0 0.0
    %550 = vmatpush1.xpose.msra.mxu0 0.0
    %551 = vmatprep.subr.mxu0 0.0
    %552 = vmatpush1.xpose.msra.mxu0 0.0
    %553 = vmatprep.subr.mxu0 0.0
    %554 = vmatpush1.xpose.msra.mxu0 0.0
    %555 = vmatprep.subr.mxu0 0.0
    %556 = vmatpush1.xpose.msra.mxu0 0.0
    %557 = vmatprep.subr.mxu0 0.0
    %558 = vmatpush1.xpose.msra.mxu0 %v525
    %559 = vmatprep.subr.mxu0 0.0
    %560 = vmatpush2.xpose.msra.mxu0 0.0
    %561 = vmatprep.subr.mxu0 0.0
    %562 = vmatpush2.xpose.msra.mxu0 0.0
    %563 = vmatprep.subr.mxu0 0.0
    %564 = vmatpush2.xpose.msra.mxu0 0.0
    %565 = vmatprep.subr.mxu0 0.0
    %566 = vmatpush2.xpose.msra.mxu0 0.0
    %567 = vmatprep.subr.mxu0 0.0
    %568 = vmatpush2.xpose.msra.mxu0 0.0
    %569 = vmatprep.subr.mxu0 0.0
    %570 = vmatpush2.xpose.msra.mxu0 0.0
    %571 = vmatprep.subr.mxu0 0.0
    %572 = vmatpush2.xpose.msra.mxu0 0.0
    %573 = vmatprep.subr.mxu0 0.0
    %574 = vmatpush2.xpose.msra.mxu0 0.0
    %575 = vmatprep.subr.mxu0 0.0
    %576 = vmatpush2.xpose.msra.mxu0 0.0
    %577 = vmatprep.subr.mxu0 0.0
    %578 = vmatpush2.xpose.msra.mxu0 0.0
    %579 = vmatprep.subr.mxu0 0.0
    %580 = vmatpush2.xpose.msra.mxu0 0.0
    %581 = vmatprep.subr.mxu0 0.0
    %582 = vmatpush2.xpose.msra.mxu0 0.0
    %583 = vmatprep.subr.mxu0 0.0
    %584 = vmatpush2.xpose.msra.mxu0 0.0
    %585 = vmatprep.subr.mxu0 0.0
    %586 = vmatpush2.xpose.msra.mxu0 0.0
    %587 = vmatprep.subr.mxu0 0.0
    %588 = vmatpush2.xpose.msra.mxu0 0.0
    %589 = vmatprep.subr.mxu0 0.0
    %590 = vmatpush2.xpose.msra.mxu0 0.0
    %591 = vmatprep.mubr.f32.mxu0 0.0
    %592 = vmatmul.mubr.f32.gmra.mxu0 %v522
    %v593 = vpop.f32.mrf.mxu0
    %v594 = vadd.f32 0.0, %v593
    %v595 = vpop.f32.mrf.mxu0
    %596 = vdwg.mxu0
    %v598 = vsel %vm159, %v256, 0
    %v601 = vsel %vm159, %v372, 0
    %603 = vmatprep.subr.mxu0 0.0
    %604 = vmatpush1.xpose.msra.mxu0 0.0
    %605 = vmatprep.subr.mxu0 0.0
    %606 = vmatpush1.xpose.msra.mxu0 0.0
    %607 = vmatprep.subr.mxu0 0.0
    %608 = vmatpush1.xpose.msra.mxu0 0.0
    %609 = vmatprep.subr.mxu0 0.0
    %610 = vmatpush1.xpose.msra.mxu0 0.0
    %611 = vmatprep.subr.mxu0 0.0
    %612 = vmatpush1.xpose.msra.mxu0 0.0
    %613 = vmatprep.subr.mxu0 0.0
    %614 = vmatpush1.xpose.msra.mxu0 0.0
    %615 = vmatprep.subr.mxu0 0.0
    %616 = vmatpush1.xpose.msra.mxu0 0.0
    %617 = vmatprep.subr.mxu0 0.0
    %618 = vmatpush1.xpose.msra.mxu0 0.0
    %619 = vmatprep.subr.mxu0 0.0
    %620 = vmatpush1.xpose.msra.mxu0 0.0
    %621 = vmatprep.subr.mxu0 0.0
    %622 = vmatpush1.xpose.msra.mxu0 0.0
    %623 = vmatprep.subr.mxu0 0.0
    %624 = vmatpush1.xpose.msra.mxu0 0.0
    %625 = vmatprep.subr.mxu0 0.0
    %626 = vmatpush1.xpose.msra.mxu0 0.0
    %627 = vmatprep.subr.mxu0 0.0
    %628 = vmatpush1.xpose.msra.mxu0 0.0
    %629 = vmatprep.subr.mxu0 0.0
    %630 = vmatpush1.xpose.msra.mxu0 0.0
    %631 = vmatprep.subr.mxu0 0.0
    %632 = vmatpush1.xpose.msra.mxu0 0.0
    %633 = vmatprep.subr.mxu0 0.0
    %634 = vmatpush1.xpose.msra.mxu0 %v601
    %635 = vmatprep.subr.mxu0 0.0
    %636 = vmatpush2.xpose.msra.mxu0 0.0
    %637 = vmatprep.subr.mxu0 0.0
    %638 = vmatpush2.xpose.msra.mxu0 0.0
    %639 = vmatprep.subr.mxu0 0.0
    %640 = vmatpush2.xpose.msra.mxu0 0.0
    %641 = vmatprep.subr.mxu0 0.0
    %642 = vmatpush2.xpose.msra.mxu0 0.0
    %643 = vmatprep.subr.mxu0 0.0
    %644 = vmatpush2.xpose.msra.mxu0 0.0
    %645 = vmatprep.subr.mxu0 0.0
    %646 = vmatpush2.xpose.msra.mxu0 0.0
    %647 = vmatprep.subr.mxu0 0.0
    %648 = vmatpush2.xpose.msra.mxu0 0.0
    %649 = vmatprep.subr.mxu0 0.0
    %650 = vmatpush2.xpose.msra.mxu0 0.0
    %651 = vmatprep.subr.mxu0 0.0
    %652 = vmatpush2.xpose.msra.mxu0 0.0
    %653 = vmatprep.subr.mxu0 0.0
    %654 = vmatpush2.xpose.msra.mxu0 0.0
    %655 = vmatprep.subr.mxu0 0.0
    %656 = vmatpush2.xpose.msra.mxu0 0.0
    %657 = vmatprep.subr.mxu0 0.0
    %658 = vmatpush2.xpose.msra.mxu0 0.0
    %659 = vmatprep.subr.mxu0 0.0
    %660 = vmatpush2.xpose.msra.mxu0 0.0
    %661 = vmatprep.subr.mxu0 0.0
    %662 = vmatpush2.xpose.msra.mxu0 0.0
    %663 = vmatprep.subr.mxu0 0.0
    %664 = vmatpush2.xpose.msra.mxu0 0.0
    %665 = vmatprep.subr.mxu0 0.0
    %666 = vmatpush2.xpose.msra.mxu0 0.0
    %667 = vmatprep.mubr.f32.mxu0 0.0
    %668 = vmatmul.mubr.f32.gmra.mxu0 %v598
    %v669 = vpop.f32.mrf.mxu0
    %v670 = vadd.f32 0.0, %v669
    %v671 = vpop.f32.mrf.mxu0
    %672 = vdwg.mxu0
    %v674 = vsel %vm159, %v261, 0
    %v677 = vsel %vm159, %v377, 0
    %679 = vmatprep.subr.mxu0 0.0
    %680 = vmatpush1.xpose.msra.mxu0 0.0
    %681 = vmatprep.subr.mxu0 0.0
    %682 = vmatpush1.xpose.msra.mxu0 0.0
    %683 = vmatprep.subr.mxu0 0.0
    %684 = vmatpush1.xpose.msra.mxu0 0.0
    %685 = vmatprep.subr.mxu0 0.0
    %686 = vmatpush1.xpose.msra.mxu0 0.0
    %687 = vmatprep.subr.mxu0 0.0
    %688 = vmatpush1.xpose.msra.mxu0 0.0
    %689 = vmatprep.subr.mxu0 0.0
    %690 = vmatpush1.xpose.msra.mxu0 0.0
    %691 = vmatprep.subr.mxu0 0.0
    %692 = vmatpush1.xpose.msra.mxu0 0.0
    %693 = vmatprep.subr.mxu0 0.0
    %694 = vmatpush1.xpose.msra.mxu0 0.0
    %695 = vmatprep.subr.mxu0 0.0
    %696 = vmatpush1.xpose.msra.mxu0 0.0
    %697 = vmatprep.subr.mxu0 0.0
    %698 = vmatpush1.xpose.msra.mxu0 0.0
    %699 = vmatprep.subr.mxu0 0.0
    %700 = vmatpush1.xpose.msra.mxu0 0.0
    %701 = vmatprep.subr.mxu0 0.0
    %702 = vmatpush1.xpose.msra.mxu0 0.0
    %703 = vmatprep.subr.mxu0 0.0
    %704 = vmatpush1.xpose.msra.mxu0 0.0
    %705 = vmatprep.subr.mxu0 0.0
    %706 = vmatpush1.xpose.msra.mxu0 0.0
    %707 = vmatprep.subr.mxu0 0.0
    %708 = vmatpush1.xpose.msra.mxu0 0.0
    %709 = vmatprep.subr.mxu0 0.0
    %710 = vmatpush1.xpose.msra.mxu0 %v677
    %711 = vmatprep.subr.mxu0 0.0
    %712 = vmatpush2.xpose.msra.mxu0 0.0
    %713 = vmatprep.subr.mxu0 0.0
    %714 = vmatpush2.xpose.msra.mxu0 0.0
    %715 = vmatprep.subr.mxu0 0.0
    %716 = vmatpush2.xpose.msra.mxu0 0.0
    %717 = vmatprep.subr.mxu0 0.0
    %718 = vmatpush2.xpose.msra.mxu0 0.0
    %719 = vmatprep.subr.mxu0 0.0
    %720 = vmatpush2.xpose.msra.mxu0 0.0
    %721 = vmatprep.subr.mxu0 0.0
    %722 = vmatpush2.xpose.msra.mxu0 0.0
    %723 = vmatprep.subr.mxu0 0.0
    %724 = vmatpush2.xpose.msra.mxu0 0.0
    %725 = vmatprep.subr.mxu0 0.0
    %726 = vmatpush2.xpose.msra.mxu0 0.0
    %727 = vmatprep.subr.mxu0 0.0
    %728 = vmatpush2.xpose.msra.mxu0 0.0
    %729 = vmatprep.subr.mxu0 0.0
    %730 = vmatpush2.xpose.msra.mxu0 0.0
    %731 = vmatprep.subr.mxu0 0.0
    %732 = vmatpush2.xpose.msra.mxu0 0.0
    %733 = vmatprep.subr.mxu0 0.0
    %734 = vmatpush2.xpose.msra.mxu0 0.0
    %735 = vmatprep.subr.mxu0 0.0
    %736 = vmatpush2.xpose.msra.mxu0 0.0
    %737 = vmatprep.subr.mxu0 0.0
    %738 = vmatpush2.xpose.msra.mxu0 0.0
    %739 = vmatprep.subr.mxu0 0.0
    %740 = vmatpush2.xpose.msra.mxu0 0.0
    %741 = vmatprep.subr.mxu0 0.0
    %742 = vmatpush2.xpose.msra.mxu0 0.0
    %743 = vmatprep.mubr.f32.mxu0 0.0
    %744 = vmatmul.mubr.f32.gmra.mxu0 %v674
    %v745 = vpop.f32.mrf.mxu0
    %v746 = vadd.f32 0.0, %v745
    %v747 = vpop.f32.mrf.mxu0
    %748 = vdwg.mxu0
    %v750 = vsel %vm159, %v266, 0
    %v753 = vsel %vm159, %v382, 0
    %755 = vmatprep.subr.mxu0 0.0
    %756 = vmatpush1.xpose.msra.mxu0 0.0
    %757 = vmatprep.subr.mxu0 0.0
    %758 = vmatpush1.xpose.msra.mxu0 0.0
    %759 = vmatprep.subr.mxu0 0.0
    %760 = vmatpush1.xpose.msra.mxu0 0.0
    %761 = vmatprep.subr.mxu0 0.0
    %762 = vmatpush1.xpose.msra.mxu0 0.0
    %763 = vmatprep.subr.mxu0 0.0
    %764 = vmatpush1.xpose.msra.mxu0 0.0
    %765 = vmatprep.subr.mxu0 0.0
    %766 = vmatpush1.xpose.msra.mxu0 0.0
    %767 = vmatprep.subr.mxu0 0.0
    %768 = vmatpush1.xpose.msra.mxu0 0.0
    %769 = vmatprep.subr.mxu0 0.0
    %770 = vmatpush1.xpose.msra.mxu0 0.0
    %771 = vmatprep.subr.mxu0 0.0
    %772 = vmatpush1.xpose.msra.mxu0 0.0
    %773 = vmatprep.subr.mxu0 0.0
    %774 = vmatpush1.xpose.msra.mxu0 0.0
    %775 = vmatprep.subr.mxu0 0.0
    %776 = vmatpush1.xpose.msra.mxu0 0.0
    %777 = vmatprep.subr.mxu0 0.0
    %778 = vmatpush1.xpose.msra.mxu0 0.0
    %779 = vmatprep.subr.mxu0 0.0
    %780 = vmatpush1.xpose.msra.mxu0 0.0
    %781 = vmatprep.subr.mxu0 0.0
    %782 = vmatpush1.xpose.msra.mxu0 0.0
    %783 = vmatprep.subr.mxu0 0.0
    %784 = vmatpush1.xpose.msra.mxu0 0.0
    %785 = vmatprep.subr.mxu0 0.0
    %786 = vmatpush1.xpose.msra.mxu0 %v753
    %787 = vmatprep.subr.mxu0 0.0
    %788 = vmatpush2.xpose.msra.mxu0 0.0
    %789 = vmatprep.subr.mxu0 0.0
    %790 = vmatpush2.xpose.msra.mxu0 0.0
    %791 = vmatprep.subr.mxu0 0.0
    %792 = vmatpush2.xpose.msra.mxu0 0.0
    %793 = vmatprep.subr.mxu0 0.0
    %794 = vmatpush2.xpose.msra.mxu0 0.0
    %795 = vmatprep.subr.mxu0 0.0
    %796 = vmatpush2.xpose.msra.mxu0 0.0
    %797 = vmatprep.subr.mxu0 0.0
    %798 = vmatpush2.xpose.msra.mxu0 0.0
    %799 = vmatprep.subr.mxu0 0.0
    %800 = vmatpush2.xpose.msra.mxu0 0.0
    %801 = vmatprep.subr.mxu0 0.0
    %802 = vmatpush2.xpose.msra.mxu0 0.0
    %803 = vmatprep.subr.mxu0 0.0
    %804 = vmatpush2.xpose.msra.mxu0 0.0
    %805 = vmatprep.subr.mxu0 0.0
    %806 = vmatpush2.xpose.msra.mxu0 0.0
    %807 = vmatprep.subr.mxu0 0.0
    %808 = vmatpush2.xpose.msra.mxu0 0.0
    %809 = vmatprep.subr.mxu0 0.0
    %810 = vmatpush2.xpose.msra.mxu0 0.0
    %811 = vmatprep.subr.mxu0 0.0
    %812 = vmatpush2.xpose.msra.mxu0 0.0
    %813 = vmatprep.subr.mxu0 0.0
    %814 = vmatpush2.xpose.msra.mxu0 0.0
    %815 = vmatprep.subr.mxu0 0.0
    %816 = vmatpush2.xpose.msra.mxu0 0.0
    %817 = vmatprep.subr.mxu0 0.0
    %818 = vmatpush2.xpose.msra.mxu0 0.0
    %819 = vmatprep.mubr.f32.mxu0 0.0
    %820 = vmatmul.mubr.f32.gmra.mxu0 %v750
    %v821 = vpop.f32.mrf.mxu0
    %v822 = vadd.f32 0.0, %v821
    %v823 = vpop.f32.mrf.mxu0
    %824 = vdwg.mxu0
    %v826 = vsel %vm159, %v271, 0
    %v829 = vsel %vm159, %v387, 0
    %831 = vmatprep.subr.mxu0 0.0
    %832 = vmatpush1.xpose.msra.mxu0 0.0
    %833 = vmatprep.subr.mxu0 0.0
    %834 = vmatpush1.xpose.msra.mxu0 0.0
    %835 = vmatprep.subr.mxu0 0.0
    %836 = vmatpush1.xpose.msra.mxu0 0.0
    %837 = vmatprep.subr.mxu0 0.0
    %838 = vmatpush1.xpose.msra.mxu0 0.0
    %839 = vmatprep.subr.mxu0 0.0
    %840 = vmatpush1.xpose.msra.mxu0 0.0
    %841 = vmatprep.subr.mxu0 0.0
    %842 = vmatpush1.xpose.msra.mxu0 0.0
    %843 = vmatprep.subr.mxu0 0.0
    %844 = vmatpush1.xpose.msra.mxu0 0.0
    %845 = vmatprep.subr.mxu0 0.0
    %846 = vmatpush1.xpose.msra.mxu0 0.0
    %847 = vmatprep.subr.mxu0 0.0
    %848 = vmatpush1.xpose.msra.mxu0 0.0
    %849 = vmatprep.subr.mxu0 0.0
    %850 = vmatpush1.xpose.msra.mxu0 0.0
    %851 = vmatprep.subr.mxu0 0.0
    %852 = vmatpush1.xpose.msra.mxu0 0.0
    %853 = vmatprep.subr.mxu0 0.0
    %854 = vmatpush1.xpose.msra.mxu0 0.0
    %855 = vmatprep.subr.mxu0 0.0
    %856 = vmatpush1.xpose.msra.mxu0 0.0
    %857 = vmatprep.subr.mxu0 0.0
    %858 = vmatpush1.xpose.msra.mxu0 0.0
    %859 = vmatprep.subr.mxu0 0.0
    %860 = vmatpush1.xpose.msra.mxu0 0.0
    %861 = vmatprep.subr.mxu0 0.0
    %862 = vmatpush1.xpose.msra.mxu0 %v829
    %863 = vmatprep.subr.mxu0 0.0
    %864 = vmatpush2.xpose.msra.mxu0 0.0
    %865 = vmatprep.subr.mxu0 0.0
    %866 = vmatpush2.xpose.msra.mxu0 0.0
    %867 = vmatprep.subr.mxu0 0.0
    %868 = vmatpush2.xpose.msra.mxu0 0.0
    %869 = vmatprep.subr.mxu0 0.0
    %870 = vmatpush2.xpose.msra.mxu0 0.0
    %871 = vmatprep.subr.mxu0 0.0
    %872 = vmatpush2.xpose.msra.mxu0 0.0
    %873 = vmatprep.subr.mxu0 0.0
    %874 = vmatpush2.xpose.msra.mxu0 0.0
    %875 = vmatprep.subr.mxu0 0.0
    %876 = vmatpush2.xpose.msra.mxu0 0.0
    %877 = vmatprep.subr.mxu0 0.0
    %878 = vmatpush2.xpose.msra.mxu0 0.0
    %879 = vmatprep.subr.mxu0 0.0
    %880 = vmatpush2.xpose.msra.mxu0 0.0
    %881 = vmatprep.subr.mxu0 0.0
    %882 = vmatpush2.xpose.msra.mxu0 0.0
    %883 = vmatprep.subr.mxu0 0.0
    %884 = vmatpush2.xpose.msra.mxu0 0.0
    %885 = vmatprep.subr.mxu0 0.0
    %886 = vmatpush2.xpose.msra.mxu0 0.0
    %887 = vmatprep.subr.mxu0 0.0
    %888 = vmatpush2.xpose.msra.mxu0 0.0
    %889 = vmatprep.subr.mxu0 0.0
    %890 = vmatpush2.xpose.msra.mxu0 0.0
    %891 = vmatprep.subr.mxu0 0.0
    %892 = vmatpush2.xpose.msra.mxu0 0.0
    %893 = vmatprep.subr.mxu0 0.0
    %894 = vmatpush2.xpose.msra.mxu0 0.0
    %895 = vmatprep.mubr.f32.mxu0 0.0
    %896 = vmatmul.mubr.f32.gmra.mxu0 %v826
    %v897 = vpop.f32.mrf.mxu0
    %v898 = vadd.f32 0.0, %v897
    %v899 = vpop.f32.mrf.mxu0
    %900 = vdwg.mxu0
    %v902 = vsel %vm159, %v276, 0
    %v905 = vsel %vm159, %v392, 0
    %907 = vmatprep.subr.mxu0 0.0
    %908 = vmatpush1.xpose.msra.mxu0 0.0
    %909 = vmatprep.subr.mxu0 0.0
    %910 = vmatpush1.xpose.msra.mxu0 0.0
    %911 = vmatprep.subr.mxu0 0.0
    %912 = vmatpush1.xpose.msra.mxu0 0.0
    %913 = vmatprep.subr.mxu0 0.0
    %914 = vmatpush1.xpose.msra.mxu0 0.0
    %915 = vmatprep.subr.mxu0 0.0
    %916 = vmatpush1.xpose.msra.mxu0 0.0
    %917 = vmatprep.subr.mxu0 0.0
    %918 = vmatpush1.xpose.msra.mxu0 0.0
    %919 = vmatprep.subr.mxu0 0.0
    %920 = vmatpush1.xpose.msra.mxu0 0.0
    %921 = vmatprep.subr.mxu0 0.0
    %922 = vmatpush1.xpose.msra.mxu0 0.0
    %923 = vmatprep.subr.mxu0 0.0
    %924 = vmatpush1.xpose.msra.mxu0 0.0
    %925 = vmatprep.subr.mxu0 0.0
    %926 = vmatpush1.xpose.msra.mxu0 0.0
    %927 = vmatprep.subr.mxu0 0.0
    %928 = vmatpush1.xpose.msra.mxu0 0.0
    %929 = vmatprep.subr.mxu0 0.0
    %930 = vmatpush1.xpose.msra.mxu0 0.0
    %931 = vmatprep.subr.mxu0 0.0
    %932 = vmatpush1.xpose.msra.mxu0 0.0
    %933 = vmatprep.subr.mxu0 0.0
    %934 = vmatpush1.xpose.msra.mxu0 0.0
    %935 = vmatprep.subr.mxu0 0.0
    %936 = vmatpush1.xpose.msra.mxu0 0.0
    %937 = vmatprep.subr.mxu0 0.0
    %938 = vmatpush1.xpose.msra.mxu0 %v905
    %939 = vmatprep.subr.mxu0 0.0
    %940 = vmatpush2.xpose.msra.mxu0 0.0
    %941 = vmatprep.subr.mxu0 0.0
    %942 = vmatpush2.xpose.msra.mxu0 0.0
    %943 = vmatprep.subr.mxu0 0.0
    %944 = vmatpush2.xpose.msra.mxu0 0.0
    %945 = vmatprep.subr.mxu0 0.0
    %946 = vmatpush2.xpose.msra.mxu0 0.0
    %947 = vmatprep.subr.mxu0 0.0
    %948 = vmatpush2.xpose.msra.mxu0 0.0
    %949 = vmatprep.subr.mxu0 0.0
    %950 = vmatpush2.xpose.msra.mxu0 0.0
    %951 = vmatprep.subr.mxu0 0.0
    %952 = vmatpush2.xpose.msra.mxu0 0.0
    %953 = vmatprep.subr.mxu0 0.0
    %954 = vmatpush2.xpose.msra.mxu0 0.0
    %955 = vmatprep.subr.mxu0 0.0
    %956 = vmatpush2.xpose.msra.mxu0 0.0
    %957 = vmatprep.subr.mxu0 0.0
    %958 = vmatpush2.xpose.msra.mxu0 0.0
    %959 = vmatprep.subr.mxu0 0.0
    %960 = vmatpush2.xpose.msra.mxu0 0.0
    %961 = vmatprep.subr.mxu0 0.0
    %962 = vmatpush2.xpose.msra.mxu0 0.0
    %963 = vmatprep.subr.mxu0 0.0
    %964 = vmatpush2.xpose.msra.mxu0 0.0
    %965 = vmatprep.subr.mxu0 0.0
    %966 = vmatpush2.xpose.msra.mxu0 0.0
    %967 = vmatprep.subr.mxu0 0.0
    %968 = vmatpush2.xpose.msra.mxu0 0.0
    %969 = vmatprep.subr.mxu0 0.0
    %970 = vmatpush2.xpose.msra.mxu0 0.0
    %971 = vmatprep.mubr.f32.mxu0 0.0
    %972 = vmatmul.mubr.f32.gmra.mxu0 %v902
    %v973 = vpop.f32.mrf.mxu0
    %v974 = vadd.f32 0.0, %v973
    %v975 = vpop.f32.mrf.mxu0
    %976 = vdwg.mxu0
    %v978 = vsel %vm159, %v281, 0
    %v981 = vsel %vm159, %v397, 0
    %983 = vmatprep.subr.mxu0 0.0
    %984 = vmatpush1.xpose.msra.mxu0 0.0
    %985 = vmatprep.subr.mxu0 0.0
    %986 = vmatpush1.xpose.msra.mxu0 0.0
    %987 = vmatprep.subr.mxu0 0.0
    %988 = vmatpush1.xpose.msra.mxu0 0.0
    %989 = vmatprep.subr.mxu0 0.0
    %990 = vmatpush1.xpose.msra.mxu0 0.0
    %991 = vmatprep.subr.mxu0 0.0
    %992 = vmatpush1.xpose.msra.mxu0 0.0
    %993 = vmatprep.subr.mxu0 0.0
    %994 = vmatpush1.xpose.msra.mxu0 0.0
    %995 = vmatprep.subr.mxu0 0.0
    %996 = vmatpush1.xpose.msra.mxu0 0.0
    %997 = vmatprep.subr.mxu0 0.0
    %998 = vmatpush1.xpose.msra.mxu0 0.0
    %999 = vmatprep.subr.mxu0 0.0
    %1000 = vmatpush1.xpose.msra.mxu0 0.0
    %1001 = vmatprep.subr.mxu0 0.0
    %1002 = vmatpush1.xpose.msra.mxu0 0.0
    %1003 = vmatprep.subr.mxu0 0.0
    %1004 = vmatpush1.xpose.msra.mxu0 0.0
    %1005 = vmatprep.subr.mxu0 0.0
    %1006 = vmatpush1.xpose.msra.mxu0 0.0
    %1007 = vmatprep.subr.mxu0 0.0
    %1008 = vmatpush1.xpose.msra.mxu0 0.0
    %1009 = vmatprep.subr.mxu0 0.0
    %1010 = vmatpush1.xpose.msra.mxu0 0.0
    %1011 = vmatprep.subr.mxu0 0.0
    %1012 = vmatpush1.xpose.msra.mxu0 0.0
    %1013 = vmatprep.subr.mxu0 0.0
    %1014 = vmatpush1.xpose.msra.mxu0 %v981
    %1015 = vmatprep.subr.mxu0 0.0
    %1016 = vmatpush2.xpose.msra.mxu0 0.0
    %1017 = vmatprep.subr.mxu0 0.0
    %1018 = vmatpush2.xpose.msra.mxu0 0.0
    %1019 = vmatprep.subr.mxu0 0.0
    %1020 = vmatpush2.xpose.msra.mxu0 0.0
    %1021 = vmatprep.subr.mxu0 0.0
    %1022 = vmatpush2.xpose.msra.mxu0 0.0
    %1023 = vmatprep.subr.mxu0 0.0
    %1024 = vmatpush2.xpose.msra.mxu0 0.0
    %1025 = vmatprep.subr.mxu0 0.0
    %1026 = vmatpush2.xpose.msra.mxu0 0.0
    %1027 = vmatprep.subr.mxu0 0.0
    %1028 = vmatpush2.xpose.msra.mxu0 0.0
    %1029 = vmatprep.subr.mxu0 0.0
    %1030 = vmatpush2.xpose.msra.mxu0 0.0
    %1031 = vmatprep.subr.mxu0 0.0
    %1032 = vmatpush2.xpose.msra.mxu0 0.0
    %1033 = vmatprep.subr.mxu0 0.0
    %1034 = vmatpush2.xpose.msra.mxu0 0.0
    %1035 = vmatprep.subr.mxu0 0.0
    %1036 = vmatpush2.xpose.msra.mxu0 0.0
    %1037 = vmatprep.subr.mxu0 0.0
    %1038 = vmatpush2.xpose.msra.mxu0 0.0
    %1039 = vmatprep.subr.mxu0 0.0
    %1040 = vmatpush2.xpose.msra.mxu0 0.0
    %1041 = vmatprep.subr.mxu0 0.0
    %1042 = vmatpush2.xpose.msra.mxu0 0.0
    %1043 = vmatprep.subr.mxu0 0.0
    %1044 = vmatpush2.xpose.msra.mxu0 0.0
    %1045 = vmatprep.subr.mxu0 0.0
    %1046 = vmatpush2.xpose.msra.mxu0 0.0
    %1047 = vmatprep.mubr.f32.mxu0 0.0
    %1048 = vmatmul.mubr.f32.gmra.mxu0 %v978
    %v1049 = vpop.f32.mrf.mxu0
    %v1050 = vadd.f32 0.0, %v1049
    %v1051 = vpop.f32.mrf.mxu0
    %1052 = vdwg.mxu0
    %v1054 = vsel %vm159, %v286, 0
    %v1057 = vsel %vm159, %v402, 0
    %1059 = vmatprep.subr.mxu0 0.0
    %1060 = vmatpush1.xpose.msra.mxu0 0.0
    %1061 = vmatprep.subr.mxu0 0.0
    %1062 = vmatpush1.xpose.msra.mxu0 0.0
    %1063 = vmatprep.subr.mxu0 0.0
    %1064 = vmatpush1.xpose.msra.mxu0 0.0
    %1065 = vmatprep.subr.mxu0 0.0
    %1066 = vmatpush1.xpose.msra.mxu0 0.0
    %1067 = vmatprep.subr.mxu0 0.0
    %1068 = vmatpush1.xpose.msra.mxu0 0.0
    %1069 = vmatprep.subr.mxu0 0.0
    %1070 = vmatpush1.xpose.msra.mxu0 0.0
    %1071 = vmatprep.subr.mxu0 0.0
    %1072 = vmatpush1.xpose.msra.mxu0 0.0
    %1073 = vmatprep.subr.mxu0 0.0
    %1074 = vmatpush1.xpose.msra.mxu0 0.0
    %1075 = vmatprep.subr.mxu0 0.0
    %1076 = vmatpush1.xpose.msra.mxu0 0.0
    %1077 = vmatprep.subr.mxu0 0.0
    %1078 = vmatpush1.xpose.msra.mxu0 0.0
    %1079 = vmatprep.subr.mxu0 0.0
    %1080 = vmatpush1.xpose.msra.mxu0 0.0
    %1081 = vmatprep.subr.mxu0 0.0
    %1082 = vmatpush1.xpose.msra.mxu0 0.0
    %1083 = vmatprep.subr.mxu0 0.0
    %1084 = vmatpush1.xpose.msra.mxu0 0.0
    %1085 = vmatprep.subr.mxu0 0.0
    %1086 = vmatpush1.xpose.msra.mxu0 0.0
    %1087 = vmatprep.subr.mxu0 0.0
    %1088 = vmatpush1.xpose.msra.mxu0 0.0
    %1089 = vmatprep.subr.mxu0 0.0
    %1090 = vmatpush1.xpose.msra.mxu0 %v1057
    %1091 = vmatprep.subr.mxu0 0.0
    %1092 = vmatpush2.xpose.msra.mxu0 0.0
    %1093 = vmatprep.subr.mxu0 0.0
    %1094 = vmatpush2.xpose.msra.mxu0 0.0
    %1095 = vmatprep.subr.mxu0 0.0
    %1096 = vmatpush2.xpose.msra.mxu0 0.0
    %1097 = vmatprep.subr.mxu0 0.0
    %1098 = vmatpush2.xpose.msra.mxu0 0.0
    %1099 = vmatprep.subr.mxu0 0.0
    %1100 = vmatpush2.xpose.msra.mxu0 0.0
    %1101 = vmatprep.subr.mxu0 0.0
    %1102 = vmatpush2.xpose.msra.mxu0 0.0
    %1103 = vmatprep.subr.mxu0 0.0
    %1104 = vmatpush2.xpose.msra.mxu0 0.0
    %1105 = vmatprep.subr.mxu0 0.0
    %1106 = vmatpush2.xpose.msra.mxu0 0.0
    %1107 = vmatprep.subr.mxu0 0.0
    %1108 = vmatpush2.xpose.msra.mxu0 0.0
    %1109 = vmatprep.subr.mxu0 0.0
    %1110 = vmatpush2.xpose.msra.mxu0 0.0
    %1111 = vmatprep.subr.mxu0 0.0
    %1112 = vmatpush2.xpose.msra.mxu0 0.0
    %1113 = vmatprep.subr.mxu0 0.0
    %1114 = vmatpush2.xpose.msra.mxu0 0.0
    %1115 = vmatprep.subr.mxu0 0.0
    %1116 = vmatpush2.xpose.msra.mxu0 0.0
    %1117 = vmatprep.subr.mxu0 0.0
    %1118 = vmatpush2.xpose.msra.mxu0 0.0
    %1119 = vmatprep.subr.mxu0 0.0
    %1120 = vmatpush2.xpose.msra.mxu0 0.0
    %1121 = vmatprep.subr.mxu0 0.0
    %1122 = vmatpush2.xpose.msra.mxu0 0.0
    %1123 = vmatprep.mubr.f32.mxu0 0.0
    %1124 = vmatmul.mubr.f32.gmra.mxu0 %v1054
    %v1125 = vpop.f32.mrf.mxu0
    %v1126 = vadd.f32 0.0, %v1125
    %v1127 = vpop.f32.mrf.mxu0
    %1128 = vdwg.mxu0
    %vm1129 = vcmask 64512
    %v1130 = vsel %vm1129, %v594, -inf
    %1131 = vmax.xlane.f32.xlu0 %v1130
    %v1132 = vpop.xlane.xlu0 %1131
    %v1133 = vsel %vm1129, %v670, -inf
    %1134 = vmax.xlane.f32.xlu0 %v1133
    %v1135 = vpop.xlane.xlu0 %1134
    %v1136 = vsel %vm1129, %v746, -inf
    %1137 = vmax.xlane.f32.xlu0 %v1136
    %v1138 = vpop.xlane.xlu0 %1137
    %v1139 = vsel %vm1129, %v822, -inf
    %1140 = vmax.xlane.f32.xlu0 %v1139
    %v1141 = vpop.xlane.xlu0 %1140
    %v1142 = vsel %vm1129, %v898, -inf
    %1143 = vmax.xlane.f32.xlu0 %v1142
    %v1144 = vpop.xlane.xlu0 %1143
    %v1145 = vsel %vm1129, %v974, -inf
    %1146 = vmax.xlane.f32.xlu0 %v1145
    %v1147 = vpop.xlane.xlu0 %1146
    %v1148 = vsel %vm1129, %v1050, -inf
    %1149 = vmax.xlane.f32.xlu0 %v1148
    %v1150 = vpop.xlane.xlu0 %1149
    %v1151 = vsel %vm1129, %v1126, -inf
    %1152 = vmax.xlane.f32.xlu0 %v1151
    %v1153 = vpop.xlane.xlu0 %1152
    %v1154 = vsub.f32 %v594, %v1132
    %v1155 = vsub.f32 %v670, %v1135
    %v1156 = vsub.f32 %v746, %v1138
    %v1157 = vsub.f32 %v822, %v1141
    %v1158 = vsub.f32 %v898, %v1144
    %v1159 = vsub.f32 %v974, %v1147
    %v1160 = vsub.f32 %v1050, %v1150
    %v1161 = vsub.f32 %v1126, %v1153
    %v1162 = vmul.f32 %v1154, 1.442695
    %v1163 = vpow.pop %v1162
    %v1164 = vmul.f32 %v1155, 1.442695
    %v1165 = vpow.pop %v1164
    %v1166 = vmul.f32 %v1156, 1.442695
    %v1167 = vpow.pop %v1166
    %v1168 = vmul.f32 %v1157, 1.442695
    %v1169 = vpow.pop %v1168
    %v1170 = vmul.f32 %v1158, 1.442695
    %v1171 = vpow.pop %v1170
    %v1172 = vmul.f32 %v1159, 1.442695
    %v1173 = vpow.pop %v1172
    %v1174 = vmul.f32 %v1160, 1.442695
    %v1175 = vpow.pop %v1174
    %v1176 = vmul.f32 %v1161, 1.442695
    %v1177 = vpow.pop %v1176
    %v1178 = vsel %vm1129, %v1163, 0.0
    %1179 = vadd.xlane.f32.xlu0 %v1178
    %v1180 = vpop.xlane.xlu0 %1179
    %v1181 = vsel %vm1129, %v1165, 0.0
    %1182 = vadd.xlane.f32.xlu0 %v1181
    %v1183 = vpop.xlane.xlu0 %1182
    %v1184 = vsel %vm1129, %v1167, 0.0
    %1185 = vadd.xlane.f32.xlu0 %v1184
    %v1186 = vpop.xlane.xlu0 %1185
    %v1187 = vsel %vm1129, %v1169, 0.0
    %1188 = vadd.xlane.f32.xlu0 %v1187
    %v1189 = vpop.xlane.xlu0 %1188
    %v1190 = vsel %vm1129, %v1171, 0.0
    %1191 = vadd.xlane.f32.xlu0 %v1190
    %v1192 = vpop.xlane.xlu0 %1191
    %v1193 = vsel %vm1129, %v1173, 0.0
    %1194 = vadd.xlane.f32.xlu0 %v1193
    %v1195 = vpop.xlane.xlu0 %1194
    %v1196 = vsel %vm1129, %v1175, 0.0
    %1197 = vadd.xlane.f32.xlu0 %v1196
    %v1198 = vpop.xlane.xlu0 %1197
    %v1199 = vsel %vm1129, %v1177, 0.0
    %1200 = vadd.xlane.f32.xlu0 %v1199
    %v1201 = vpop.xlane.xlu0 %1200
    %v1202 = vrcp.pop %v1180
    %v1203 = vrcp.pop %v1183
    %v1204 = vrcp.pop %v1186
    %v1205 = vrcp.pop %v1189
    %v1206 = vrcp.pop %v1192
    %v1207 = vrcp.pop %v1195
    %v1208 = vrcp.pop %v1198
    %v1209 = vrcp.pop %v1201
    %v1210 = vmul.f32 %v1163, %v1202
    %v1211 = vmul.f32 %v1165, %v1203
    %v1212 = vmul.f32 %v1167, %v1204
    %v1213 = vmul.f32 %v1169, %v1205
    %v1214 = vmul.f32 %v1171, %v1206
    %v1215 = vmul.f32 %v1173, %v1207
    %v1216 = vmul.f32 %v1175, %v1208
    %v1217 = vmul.f32 %v1177, %v1209
    %v1219 = vsel %vm1129, %v1210, 0
    %1221 = vmatprep.subr.mxu0 0.0
    %1222 = vmatpush1.msra.mxu0 0.0
    %1223 = vmatprep.subr.mxu0 0.0
    %1224 = vmatpush1.msra.mxu0 0.0
    %1225 = vmatprep.subr.mxu0 0.0
    %1226 = vmatpush1.msra.mxu0 0.0
    %1227 = vmatprep.subr.mxu0 0.0
    %1228 = vmatpush1.msra.mxu0 0.0
    %1229 = vmatprep.subr.mxu0 0.0
    %1230 = vmatpush1.msra.mxu0 0.0
    %1231 = vmatprep.subr.mxu0 0.0
    %1232 = vmatpush1.msra.mxu0 0.0
    %1233 = vmatprep.subr.mxu0 0.0
    %1234 = vmatpush1.msra.mxu0 0.0
    %1235 = vmatprep.subr.mxu0 0.0
    %1236 = vmatpush1.msra.mxu0 0.0
    %1237 = vmatprep.subr.mxu0 0.0
    %1238 = vmatpush1.msra.mxu0 0.0
    %1239 = vmatprep.subr.mxu0 0.0
    %1240 = vmatpush1.msra.mxu0 0.0
    %1241 = vmatprep.subr.mxu0 0.0
    %1242 = vmatpush1.msra.mxu0 0.0
    %1243 = vmatprep.subr.mxu0 0.0
    %1244 = vmatpush1.msra.mxu0 0.0
    %1245 = vmatprep.subr.mxu0 0.0
    %1246 = vmatpush1.msra.mxu0 0.0
    %1247 = vmatprep.subr.mxu0 0.0
    %1248 = vmatpush1.msra.mxu0 0.0
    %1249 = vmatprep.subr.mxu0 0.0
    %1250 = vmatpush1.msra.mxu0 0.0
    %1251 = vmatprep.subr.mxu0 0.0
    %1252 = vmatpush1.msra.mxu0 %v483
    %1253 = vmatprep.subr.mxu0 0.0
    %1254 = vmatpush2.msra.mxu0 0.0
    %1255 = vmatprep.subr.mxu0 0.0
    %1256 = vmatpush2.msra.mxu0 0.0
    %1257 = vmatprep.subr.mxu0 0.0
    %1258 = vmatpush2.msra.mxu0 0.0
    %1259 = vmatprep.subr.mxu0 0.0
    %1260 = vmatpush2.msra.mxu0 0.0
    %1261 = vmatprep.subr.mxu0 0.0
    %1262 = vmatpush2.msra.mxu0 0.0
    %1263 = vmatprep.subr.mxu0 0.0
    %1264 = vmatpush2.msra.mxu0 0.0
    %1265 = vmatprep.subr.mxu0 0.0
    %1266 = vmatpush2.msra.mxu0 0.0
    %1267 = vmatprep.subr.mxu0 0.0
    %1268 = vmatpush2.msra.mxu0 0.0
    %1269 = vmatprep.subr.mxu0 0.0
    %1270 = vmatpush2.msra.mxu0 0.0
    %1271 = vmatprep.subr.mxu0 0.0
    %1272 = vmatpush2.msra.mxu0 0.0
    %1273 = vmatprep.subr.mxu0 0.0
    %1274 = vmatpush2.msra.mxu0 0.0
    %1275 = vmatprep.subr.mxu0 0.0
    %1276 = vmatpush2.msra.mxu0 0.0
    %1277 = vmatprep.subr.mxu0 0.0
    %1278 = vmatpush2.msra.mxu0 0.0
    %1279 = vmatprep.subr.mxu0 0.0
    %1280 = vmatpush2.msra.mxu0 0.0
    %1281 = vmatprep.subr.mxu0 0.0
    %1282 = vmatpush2.msra.mxu0 0.0
    %1283 = vmatprep.subr.mxu0 0.0
    %1284 = vmatpush2.msra.mxu0 0.0
    %1285 = vmatprep.mubr.f32.mxu0 0.0
    %1286 = vmatmul.mubr.f32.gmra.mxu0 %v1219
    %v1287 = vpop.f32.mrf.mxu0
    %v1288 = vadd.f32 0.0, %v1287
    %v1289 = vpop.f32.mrf.mxu0
    %1290 = vdwg.mxu0
    %v1292 = vsel %vm1129, %v1211, 0
    %1294 = vmatprep.subr.mxu0 0.0
    %1295 = vmatpush1.msra.mxu0 0.0
    %1296 = vmatprep.subr.mxu0 0.0
    %1297 = vmatpush1.msra.mxu0 0.0
    %1298 = vmatprep.subr.mxu0 0.0
    %1299 = vmatpush1.msra.mxu0 0.0
    %1300 = vmatprep.subr.mxu0 0.0
    %1301 = vmatpush1.msra.mxu0 0.0
    %1302 = vmatprep.subr.mxu0 0.0
    %1303 = vmatpush1.msra.mxu0 0.0
    %1304 = vmatprep.subr.mxu0 0.0
    %1305 = vmatpush1.msra.mxu0 0.0
    %1306 = vmatprep.subr.mxu0 0.0
    %1307 = vmatpush1.msra.mxu0 0.0
    %1308 = vmatprep.subr.mxu0 0.0
    %1309 = vmatpush1.msra.mxu0 0.0
    %1310 = vmatprep.subr.mxu0 0.0
    %1311 = vmatpush1.msra.mxu0 0.0
    %1312 = vmatprep.subr.mxu0 0.0
    %1313 = vmatpush1.msra.mxu0 0.0
    %1314 = vmatprep.subr.mxu0 0.0
    %1315 = vmatpush1.msra.mxu0 0.0
    %1316 = vmatprep.subr.mxu0 0.0
    %1317 = vmatpush1.msra.mxu0 0.0
    %1318 = vmatprep.subr.mxu0 0.0
    %1319 = vmatpush1.msra.mxu0 0.0
    %1320 = vmatprep.subr.mxu0 0.0
    %1321 = vmatpush1.msra.mxu0 0.0
    %1322 = vmatprep.subr.mxu0 0.0
    %1323 = vmatpush1.msra.mxu0 0.0
    %1324 = vmatprep.subr.mxu0 0.0
    %1325 = vmatpush1.msra.mxu0 %v488
    %1326 = vmatprep.subr.mxu0 0.0
    %1327 = vmatpush2.msra.mxu0 0.0
    %1328 = vmatprep.subr.mxu0 0.0
    %1329 = vmatpush2.msra.mxu0 0.0
    %1330 = vmatprep.subr.mxu0 0.0
    %1331 = vmatpush2.msra.mxu0 0.0
    %1332 = vmatprep.subr.mxu0 0.0
    %1333 = vmatpush2.msra.mxu0 0.0
    %1334 = vmatprep.subr.mxu0 0.0
    %1335 = vmatpush2.msra.mxu0 0.0
    %1336 = vmatprep.subr.mxu0 0.0
    %1337 = vmatpush2.msra.mxu0 0.0
    %1338 = vmatprep.subr.mxu0 0.0
    %1339 = vmatpush2.msra.mxu0 0.0
    %1340 = vmatprep.subr.mxu0 0.0
    %1341 = vmatpush2.msra.mxu0 0.0
    %1342 = vmatprep.subr.mxu0 0.0
    %1343 = vmatpush2.msra.mxu0 0.0
    %1344 = vmatprep.subr.mxu0 0.0
    %1345 = vmatpush2.msra.mxu0 0.0
    %1346 = vmatprep.subr.mxu0 0.0
    %1347 = vmatpush2.msra.mxu0 0.0
    %1348 = vmatprep.subr.mxu0 0.0
    %1349 = vmatpush2.msra.mxu0 0.0
    %1350 = vmatprep.subr.mxu0 0.0
    %1351 = vmatpush2.msra.mxu0 0.0
    %1352 = vmatprep.subr.mxu0 0.0
    %1353 = vmatpush2.msra.mxu0 0.0
    %1354 = vmatprep.subr.mxu0 0.0
    %1355 = vmatpush2.msra.mxu0 0.0
    %1356 = vmatprep.subr.mxu0 0.0
    %1357 = vmatpush2.msra.mxu0 0.0
    %1358 = vmatprep.mubr.f32.mxu0 0.0
    %1359 = vmatmul.mubr.f32.gmra.mxu0 %v1292
    %v1360 = vpop.f32.mrf.mxu0
    %v1361 = vadd.f32 0.0, %v1360
    %v1362 = vpop.f32.mrf.mxu0
    %1363 = vdwg.mxu0
    %v1365 = vsel %vm1129, %v1212, 0
    %1367 = vmatprep.subr.mxu0 0.0
    %1368 = vmatpush1.msra.mxu0 0.0
    %1369 = vmatprep.subr.mxu0 0.0
    %1370 = vmatpush1.msra.mxu0 0.0
    %1371 = vmatprep.subr.mxu0 0.0
    %1372 = vmatpush1.msra.mxu0 0.0
    %1373 = vmatprep.subr.mxu0 0.0
    %1374 = vmatpush1.msra.mxu0 0.0
    %1375 = vmatprep.subr.mxu0 0.0
    %1376 = vmatpush1.msra.mxu0 0.0
    %1377 = vmatprep.subr.mxu0 0.0
    %1378 = vmatpush1.msra.mxu0 0.0
    %1379 = vmatprep.subr.mxu0 0.0
    %1380 = vmatpush1.msra.mxu0 0.0
    %1381 = vmatprep.subr.mxu0 0.0
    %1382 = vmatpush1.msra.mxu0 0.0
    %1383 = vmatprep.subr.mxu0 0.0
    %1384 = vmatpush1.msra.mxu0 0.0
    %1385 = vmatprep.subr.mxu0 0.0
    %1386 = vmatpush1.msra.mxu0 0.0
    %1387 = vmatprep.subr.mxu0 0.0
    %1388 = vmatpush1.msra.mxu0 0.0
    %1389 = vmatprep.subr.mxu0 0.0
    %1390 = vmatpush1.msra.mxu0 0.0
    %1391 = vmatprep.subr.mxu0 0.0
    %1392 = vmatpush1.msra.mxu0 0.0
    %1393 = vmatprep.subr.mxu0 0.0
    %1394 = vmatpush1.msra.mxu0 0.0
    %1395 = vmatprep.subr.mxu0 0.0
    %1396 = vmatpush1.msra.mxu0 0.0
    %1397 = vmatprep.subr.mxu0 0.0
    %1398 = vmatpush1.msra.mxu0 %v493
    %1399 = vmatprep.subr.mxu0 0.0
    %1400 = vmatpush2.msra.mxu0 0.0
    %1401 = vmatprep.subr.mxu0 0.0
    %1402 = vmatpush2.msra.mxu0 0.0
    %1403 = vmatprep.subr.mxu0 0.0
    %1404 = vmatpush2.msra.mxu0 0.0
    %1405 = vmatprep.subr.mxu0 0.0
    %1406 = vmatpush2.msra.mxu0 0.0
    %1407 = vmatprep.subr.mxu0 0.0
    %1408 = vmatpush2.msra.mxu0 0.0
    %1409 = vmatprep.subr.mxu0 0.0
    %1410 = vmatpush2.msra.mxu0 0.0
    %1411 = vmatprep.subr.mxu0 0.0
    %1412 = vmatpush2.msra.mxu0 0.0
    %1413 = vmatprep.subr.mxu0 0.0
    %1414 = vmatpush2.msra.mxu0 0.0
    %1415 = vmatprep.subr.mxu0 0.0
    %1416 = vmatpush2.msra.mxu0 0.0
    %1417 = vmatprep.subr.mxu0 0.0
    %1418 = vmatpush2.msra.mxu0 0.0
    %1419 = vmatprep.subr.mxu0 0.0
    %1420 = vmatpush2.msra.mxu0 0.0
    %1421 = vmatprep.subr.mxu0 0.0
    %1422 = vmatpush2.msra.mxu0 0.0
    %1423 = vmatprep.subr.mxu0 0.0
    %1424 = vmatpush2.msra.mxu0 0.0
    %1425 = vmatprep.subr.mxu0 0.0
    %1426 = vmatpush2.msra.mxu0 0.0
    %1427 = vmatprep.subr.mxu0 0.0
    %1428 = vmatpush2.msra.mxu0 0.0
    %1429 = vmatprep.subr.mxu0 0.0
    %1430 = vmatpush2.msra.mxu0 0.0
    %1431 = vmatprep.mubr.f32.mxu0 0.0
    %1432 = vmatmul.mubr.f32.gmra.mxu0 %v1365
    %v1433 = vpop.f32.mrf.mxu0
    %v1434 = vadd.f32 0.0, %v1433
    %v1435 = vpop.f32.mrf.mxu0
    %1436 = vdwg.mxu0
    %v1438 = vsel %vm1129, %v1213, 0
    %1440 = vmatprep.subr.mxu0 0.0
    %1441 = vmatpush1.msra.mxu0 0.0
    %1442 = vmatprep.subr.mxu0 0.0
    %1443 = vmatpush1.msra.mxu0 0.0
    %1444 = vmatprep.subr.mxu0 0.0
    %1445 = vmatpush1.msra.mxu0 0.0
    %1446 = vmatprep.subr.mxu0 0.0
    %1447 = vmatpush1.msra.mxu0 0.0
    %1448 = vmatprep.subr.mxu0 0.0
    %1449 = vmatpush1.msra.mxu0 0.0
    %1450 = vmatprep.subr.mxu0 0.0
    %1451 = vmatpush1.msra.mxu0 0.0
    %1452 = vmatprep.subr.mxu0 0.0
    %1453 = vmatpush1.msra.mxu0 0.0
    %1454 = vmatprep.subr.mxu0 0.0
    %1455 = vmatpush1.msra.mxu0 0.0
    %1456 = vmatprep.subr.mxu0 0.0
    %1457 = vmatpush1.msra.mxu0 0.0
    %1458 = vmatprep.subr.mxu0 0.0
    %1459 = vmatpush1.msra.mxu0 0.0
    %1460 = vmatprep.subr.mxu0 0.0
    %1461 = vmatpush1.msra.mxu0 0.0
    %1462 = vmatprep.subr.mxu0 0.0
    %1463 = vmatpush1.msra.mxu0 0.0
    %1464 = vmatprep.subr.mxu0 0.0
    %1465 = vmatpush1.msra.mxu0 0.0
    %1466 = vmatprep.subr.mxu0 0.0
    %1467 = vmatpush1.msra.mxu0 0.0
    %1468 = vmatprep.subr.mxu0 0.0
    %1469 = vmatpush1.msra.mxu0 0.0
    %1470 = vmatprep.subr.mxu0 0.0
    %1471 = vmatpush1.msra.mxu0 %v498
    %1472 = vmatprep.subr.mxu0 0.0
    %1473 = vmatpush2.msra.mxu0 0.0
    %1474 = vmatprep.subr.mxu0 0.0
    %1475 = vmatpush2.msra.mxu0 0.0
    %1476 = vmatprep.subr.mxu0 0.0
    %1477 = vmatpush2.msra.mxu0 0.0
    %1478 = vmatprep.subr.mxu0 0.0
    %1479 = vmatpush2.msra.mxu0 0.0
    %1480 = vmatprep.subr.mxu0 0.0
    %1481 = vmatpush2.msra.mxu0 0.0
    %1482 = vmatprep.subr.mxu0 0.0
    %1483 = vmatpush2.msra.mxu0 0.0
    %1484 = vmatprep.subr.mxu0 0.0
    %1485 = vmatpush2.msra.mxu0 0.0
    %1486 = vmatprep.subr.mxu0 0.0
    %1487 = vmatpush2.msra.mxu0 0.0
    %1488 = vmatprep.subr.mxu0 0.0
    %1489 = vmatpush2.msra.mxu0 0.0
    %1490 = vmatprep.subr.mxu0 0.0
    %1491 = vmatpush2.msra.mxu0 0.0
    %1492 = vmatprep.subr.mxu0 0.0
    %1493 = vmatpush2.msra.mxu0 0.0
    %1494 = vmatprep.subr.mxu0 0.0
    %1495 = vmatpush2.msra.mxu0 0.0
    %1496 = vmatprep.subr.mxu0 0.0
    %1497 = vmatpush2.msra.mxu0 0.0
    %1498 = vmatprep.subr.mxu0 0.0
    %1499 = vmatpush2.msra.mxu0 0.0
    %1500 = vmatprep.subr.mxu0 0.0
    %1501 = vmatpush2.msra.mxu0 0.0
    %1502 = vmatprep.subr.mxu0 0.0
    %1503 = vmatpush2.msra.mxu0 0.0
    %1504 = vmatprep.mubr.f32.mxu0 0.0
    %1505 = vmatmul.mubr.f32.gmra.mxu0 %v1438
    %v1506 = vpop.f32.mrf.mxu0
    %v1507 = vadd.f32 0.0, %v1506
    %v1508 = vpop.f32.mrf.mxu0
    %1509 = vdwg.mxu0
    %v1511 = vsel %vm1129, %v1214, 0
    %1513 = vmatprep.subr.mxu0 0.0
    %1514 = vmatpush1.msra.mxu0 0.0
    %1515 = vmatprep.subr.mxu0 0.0
    %1516 = vmatpush1.msra.mxu0 0.0
    %1517 = vmatprep.subr.mxu0 0.0
    %1518 = vmatpush1.msra.mxu0 0.0
    %1519 = vmatprep.subr.mxu0 0.0
    %1520 = vmatpush1.msra.mxu0 0.0
    %1521 = vmatprep.subr.mxu0 0.0
    %1522 = vmatpush1.msra.mxu0 0.0
    %1523 = vmatprep.subr.mxu0 0.0
    %1524 = vmatpush1.msra.mxu0 0.0
    %1525 = vmatprep.subr.mxu0 0.0
    %1526 = vmatpush1.msra.mxu0 0.0
    %1527 = vmatprep.subr.mxu0 0.0
    %1528 = vmatpush1.msra.mxu0 0.0
    %1529 = vmatprep.subr.mxu0 0.0
    %1530 = vmatpush1.msra.mxu0 0.0
    %1531 = vmatprep.subr.mxu0 0.0
    %1532 = vmatpush1.msra.mxu0 0.0
    %1533 = vmatprep.subr.mxu0 0.0
    %1534 = vmatpush1.msra.mxu0 0.0
    %1535 = vmatprep.subr.mxu0 0.0
    %1536 = vmatpush1.msra.mxu0 0.0
    %1537 = vmatprep.subr.mxu0 0.0
    %1538 = vmatpush1.msra.mxu0 0.0
    %1539 = vmatprep.subr.mxu0 0.0
    %1540 = vmatpush1.msra.mxu0 0.0
    %1541 = vmatprep.subr.mxu0 0.0
    %1542 = vmatpush1.msra.mxu0 0.0
    %1543 = vmatprep.subr.mxu0 0.0
    %1544 = vmatpush1.msra.mxu0 %v503
    %1545 = vmatprep.subr.mxu0 0.0
    %1546 = vmatpush2.msra.mxu0 0.0
    %1547 = vmatprep.subr.mxu0 0.0
    %1548 = vmatpush2.msra.mxu0 0.0
    %1549 = vmatprep.subr.mxu0 0.0
    %1550 = vmatpush2.msra.mxu0 0.0
    %1551 = vmatprep.subr.mxu0 0.0
    %1552 = vmatpush2.msra.mxu0 0.0
    %1553 = vmatprep.subr.mxu0 0.0
    %1554 = vmatpush2.msra.mxu0 0.0
    %1555 = vmatprep.subr.mxu0 0.0
    %1556 = vmatpush2.msra.mxu0 0.0
    %1557 = vmatprep.subr.mxu0 0.0
    %1558 = vmatpush2.msra.mxu0 0.0
    %1559 = vmatprep.subr.mxu0 0.0
    %1560 = vmatpush2.msra.mxu0 0.0
    %1561 = vmatprep.subr.mxu0 0.0
    %1562 = vmatpush2.msra.mxu0 0.0
    %1563 = vmatprep.subr.mxu0 0.0
    %1564 = vmatpush2.msra.mxu0 0.0
    %1565 = vmatprep.subr.mxu0 0.0
    %1566 = vmatpush2.msra.mxu0 0.0
    %1567 = vmatprep.subr.mxu0 0.0
    %1568 = vmatpush2.msra.mxu0 0.0
    %1569 = vmatprep.subr.mxu0 0.0
    %1570 = vmatpush2.msra.mxu0 0.0
    %1571 = vmatprep.subr.mxu0 0.0
    %1572 = vmatpush2.msra.mxu0 0.0
    %1573 = vmatprep.subr.mxu0 0.0
    %1574 = vmatpush2.msra.mxu0 0.0
    %1575 = vmatprep.subr.mxu0 0.0
    %1576 = vmatpush2.msra.mxu0 0.0
    %1577 = vmatprep.mubr.f32.mxu0 0.0
    %1578 = vmatmul.mubr.f32.gmra.mxu0 %v1511
    %v1579 = vpop.f32.mrf.mxu0
    %v1580 = vadd.f32 0.0, %v1579
    %v1581 = vpop.f32.mrf.mxu0
    %1582 = vdwg.mxu0
    %v1584 = vsel %vm1129, %v1215, 0
    %1586 = vmatprep.subr.mxu0 0.0
    %1587 = vmatpush1.msra.mxu0 0.0
    %1588 = vmatprep.subr.mxu0 0.0
    %1589 = vmatpush1.msra.mxu0 0.0
    %1590 = vmatprep.subr.mxu0 0.0
    %1591 = vmatpush1.msra.mxu0 0.0
    %1592 = vmatprep.subr.mxu0 0.0
    %1593 = vmatpush1.msra.mxu0 0.0
    %1594 = vmatprep.subr.mxu0 0.0
    %1595 = vmatpush1.msra.mxu0 0.0
    %1596 = vmatprep.subr.mxu0 0.0
    %1597 = vmatpush1.msra.mxu0 0.0
    %1598 = vmatprep.subr.mxu0 0.0
    %1599 = vmatpush1.msra.mxu0 0.0
    %1600 = vmatprep.subr.mxu0 0.0
    %1601 = vmatpush1.msra.mxu0 0.0
    %1602 = vmatprep.subr.mxu0 0.0
    %1603 = vmatpush1.msra.mxu0 0.0
    %1604 = vmatprep.subr.mxu0 0.0
    %1605 = vmatpush1.msra.mxu0 0.0
    %1606 = vmatprep.subr.mxu0 0.0
    %1607 = vmatpush1.msra.mxu0 0.0
    %1608 = vmatprep.subr.mxu0 0.0
    %1609 = vmatpush1.msra.mxu0 0.0
    %1610 = vmatprep.subr.mxu0 0.0
    %1611 = vmatpush1.msra.mxu0 0.0
    %1612 = vmatprep.subr.mxu0 0.0
    %1613 = vmatpush1.msra.mxu0 0.0
    %1614 = vmatprep.subr.mxu0 0.0
    %1615 = vmatpush1.msra.mxu0 0.0
    %1616 = vmatprep.subr.mxu0 0.0
    %1617 = vmatpush1.msra.mxu0 %v508
    %1618 = vmatprep.subr.mxu0 0.0
    %1619 = vmatpush2.msra.mxu0 0.0
    %1620 = vmatprep.subr.mxu0 0.0
    %1621 = vmatpush2.msra.mxu0 0.0
    %1622 = vmatprep.subr.mxu0 0.0
    %1623 = vmatpush2.msra.mxu0 0.0
    %1624 = vmatprep.subr.mxu0 0.0
    %1625 = vmatpush2.msra.mxu0 0.0
    %1626 = vmatprep.subr.mxu0 0.0
    %1627 = vmatpush2.msra.mxu0 0.0
    %1628 = vmatprep.subr.mxu0 0.0
    %1629 = vmatpush2.msra.mxu0 0.0
    %1630 = vmatprep.subr.mxu0 0.0
    %1631 = vmatpush2.msra.mxu0 0.0
    %1632 = vmatprep.subr.mxu0 0.0
    %1633 = vmatpush2.msra.mxu0 0.0
    %1634 = vmatprep.subr.mxu0 0.0
    %1635 = vmatpush2.msra.mxu0 0.0
    %1636 = vmatprep.subr.mxu0 0.0
    %1637 = vmatpush2.msra.mxu0 0.0
    %1638 = vmatprep.subr.mxu0 0.0
    %1639 = vmatpush2.msra.mxu0 0.0
    %1640 = vmatprep.subr.mxu0 0.0
    %1641 = vmatpush2.msra.mxu0 0.0
    %1642 = vmatprep.subr.mxu0 0.0
    %1643 = vmatpush2.msra.mxu0 0.0
    %1644 = vmatprep.subr.mxu0 0.0
    %1645 = vmatpush2.msra.mxu0 0.0
    %1646 = vmatprep.subr.mxu0 0.0
    %1647 = vmatpush2.msra.mxu0 0.0
    %1648 = vmatprep.subr.mxu0 0.0
    %1649 = vmatpush2.msra.mxu0 0.0
    %1650 = vmatprep.mubr.f32.mxu0 0.0
    %1651 = vmatmul.mubr.f32.gmra.mxu0 %v1584
    %v1652 = vpop.f32.mrf.mxu0
    %v1653 = vadd.f32 0.0, %v1652
    %v1654 = vpop.f32.mrf.mxu0
    %1655 = vdwg.mxu0
    %v1657 = vsel %vm1129, %v1216, 0
    %1659 = vmatprep.subr.mxu0 0.0
    %1660 = vmatpush1.msra.mxu0 0.0
    %1661 = vmatprep.subr.mxu0 0.0
    %1662 = vmatpush1.msra.mxu0 0.0
    %1663 = vmatprep.subr.mxu0 0.0
    %1664 = vmatpush1.msra.mxu0 0.0
    %1665 = vmatprep.subr.mxu0 0.0
    %1666 = vmatpush1.msra.mxu0 0.0
    %1667 = vmatprep.subr.mxu0 0.0
    %1668 = vmatpush1.msra.mxu0 0.0
    %1669 = vmatprep.subr.mxu0 0.0
    %1670 = vmatpush1.msra.mxu0 0.0
    %1671 = vmatprep.subr.mxu0 0.0
    %1672 = vmatpush1.msra.mxu0 0.0
    %1673 = vmatprep.subr.mxu0 0.0
    %1674 = vmatpush1.msra.mxu0 0.0
    %1675 = vmatprep.subr.mxu0 0.0
    %1676 = vmatpush1.msra.mxu0 0.0
    %1677 = vmatprep.subr.mxu0 0.0
    %1678 = vmatpush1.msra.mxu0 0.0
    %1679 = vmatprep.subr.mxu0 0.0
    %1680 = vmatpush1.msra.mxu0 0.0
    %1681 = vmatprep.subr.mxu0 0.0
    %1682 = vmatpush1.msra.mxu0 0.0
    %1683 = vmatprep.subr.mxu0 0.0
    %1684 = vmatpush1.msra.mxu0 0.0
    %1685 = vmatprep.subr.mxu0 0.0
    %1686 = vmatpush1.msra.mxu0 0.0
    %1687 = vmatprep.subr.mxu0 0.0
    %1688 = vmatpush1.msra.mxu0 0.0
    %1689 = vmatprep.subr.mxu0 0.0
    %1690 = vmatpush1.msra.mxu0 %v513
    %1691 = vmatprep.subr.mxu0 0.0
    %1692 = vmatpush2.msra.mxu0 0.0
    %1693 = vmatprep.subr.mxu0 0.0
    %1694 = vmatpush2.msra.mxu0 0.0
    %1695 = vmatprep.subr.mxu0 0.0
    %1696 = vmatpush2.msra.mxu0 0.0
    %1697 = vmatprep.subr.mxu0 0.0
    %1698 = vmatpush2.msra.mxu0 0.0
    %1699 = vmatprep.subr.mxu0 0.0
    %1700 = vmatpush2.msra.mxu0 0.0
    %1701 = vmatprep.subr.mxu0 0.0
    %1702 = vmatpush2.msra.mxu0 0.0
    %1703 = vmatprep.subr.mxu0 0.0
    %1704 = vmatpush2.msra.mxu0 0.0
    %1705 = vmatprep.subr.mxu0 0.0
    %1706 = vmatpush2.msra.mxu0 0.0
    %1707 = vmatprep.subr.mxu0 0.0
    %1708 = vmatpush2.msra.mxu0 0.0
    %1709 = vmatprep.subr.mxu0 0.0
    %1710 = vmatpush2.msra.mxu0 0.0
    %1711 = vmatprep.subr.mxu0 0.0
    %1712 = vmatpush2.msra.mxu0 0.0
    %1713 = vmatprep.subr.mxu0 0.0
    %1714 = vmatpush2.msra.mxu0 0.0
    %1715 = vmatprep.subr.mxu0 0.0
    %1716 = vmatpush2.msra.mxu0 0.0
    %1717 = vmatprep.subr.mxu0 0.0
    %1718 = vmatpush2.msra.mxu0 0.0
    %1719 = vmatprep.subr.mxu0 0.0
    %1720 = vmatpush2.msra.mxu0 0.0
    %1721 = vmatprep.subr.mxu0 0.0
    %1722 = vmatpush2.msra.mxu0 0.0
    %1723 = vmatprep.mubr.f32.mxu0 0.0
    %1724 = vmatmul.mubr.f32.gmra.mxu0 %v1657
    %v1725 = vpop.f32.mrf.mxu0
    %v1726 = vadd.f32 0.0, %v1725
    %v1727 = vpop.f32.mrf.mxu0
    %1728 = vdwg.mxu0
    %v1730 = vsel %vm1129, %v1217, 0
    %1732 = vmatprep.subr.mxu0 0.0
    %1733 = vmatpush1.msra.mxu0 0.0
    %1734 = vmatprep.subr.mxu0 0.0
    %1735 = vmatpush1.msra.mxu0 0.0
    %1736 = vmatprep.subr.mxu0 0.0
    %1737 = vmatpush1.msra.mxu0 0.0
    %1738 = vmatprep.subr.mxu0 0.0
    %1739 = vmatpush1.msra.mxu0 0.0
    %1740 = vmatprep.subr.mxu0 0.0
    %1741 = vmatpush1.msra.mxu0 0.0
    %1742 = vmatprep.subr.mxu0 0.0
    %1743 = vmatpush1.msra.mxu0 0.0
    %1744 = vmatprep.subr.mxu0 0.0
    %1745 = vmatpush1.msra.mxu0 0.0
    %1746 = vmatprep.subr.mxu0 0.0
    %1747 = vmatpush1.msra.mxu0 0.0
    %1748 = vmatprep.subr.mxu0 0.0
    %1749 = vmatpush1.msra.mxu0 0.0
    %1750 = vmatprep.subr.mxu0 0.0
    %1751 = vmatpush1.msra.mxu0 0.0
    %1752 = vmatprep.subr.mxu0 0.0
    %1753 = vmatpush1.msra.mxu0 0.0
    %1754 = vmatprep.subr.mxu0 0.0
    %1755 = vmatpush1.msra.mxu0 0.0
    %1756 = vmatprep.subr.mxu0 0.0
    %1757 = vmatpush1.msra.mxu0 0.0
    %1758 = vmatprep.subr.mxu0 0.0
    %1759 = vmatpush1.msra.mxu0 0.0
    %1760 = vmatprep.subr.mxu0 0.0
    %1761 = vmatpush1.msra.mxu0 0.0
    %1762 = vmatprep.subr.mxu0 0.0
    %1763 = vmatpush1.msra.mxu0 %v518
    %1764 = vmatprep.subr.mxu0 0.0
    %1765 = vmatpush2.msra.mxu0 0.0
    %1766 = vmatprep.subr.mxu0 0.0
    %1767 = vmatpush2.msra.mxu0 0.0
    %1768 = vmatprep.subr.mxu0 0.0
    %1769 = vmatpush2.msra.mxu0 0.0
    %1770 = vmatprep.subr.mxu0 0.0
    %1771 = vmatpush2.msra.mxu0 0.0
    %1772 = vmatprep.subr.mxu0 0.0
    %1773 = vmatpush2.msra.mxu0 0.0
    %1774 = vmatprep.subr.mxu0 0.0
    %1775 = vmatpush2.msra.mxu0 0.0
    %1776 = vmatprep.subr.mxu0 0.0
    %1777 = vmatpush2.msra.mxu0 0.0
    %1778 = vmatprep.subr.mxu0 0.0
    %1779 = vmatpush2.msra.mxu0 0.0
    %1780 = vmatprep.subr.mxu0 0.0
    %1781 = vmatpush2.msra.mxu0 0.0
    %1782 = vmatprep.subr.mxu0 0.0
    %1783 = vmatpush2.msra.mxu0 0.0
    %1784 = vmatprep.subr.mxu0 0.0
    %1785 = vmatpush2.msra.mxu0 0.0
    %1786 = vmatprep.subr.mxu0 0.0
    %1787 = vmatpush2.msra.mxu0 0.0
    %1788 = vmatprep.subr.mxu0 0.0
    %1789 = vmatpush2.msra.mxu0 0.0
    %1790 = vmatprep.subr.mxu0 0.0
    %1791 = vmatpush2.msra.mxu0 0.0
    %1792 = vmatprep.subr.mxu0 0.0
    %1793 = vmatpush2.msra.mxu0 0.0
    %1794 = vmatprep.subr.mxu0 0.0
    %1795 = vmatpush2.msra.mxu0 0.0
    %1796 = vmatprep.mubr.f32.mxu0 0.0
    %1797 = vmatmul.mubr.f32.gmra.mxu0 %v1730
    %v1798 = vpop.f32.mrf.mxu0
    %v1799 = vadd.f32 0.0, %v1798
    %v1800 = vpop.f32.mrf.mxu0
    %1801 = vdwg.mxu0
    %v1802 = vld [vmem:[#allocation10] sm:$0xff]
    %v1803 = vld [vmem:[#allocation10 + $0x8] sm:$0xff]
    %v1804 = vld [vmem:[#allocation10 + $0x10] sm:$0xff]
    %v1805 = vld [vmem:[#allocation10 + $0x18] sm:$0xff]
    %v1806 = vld [vmem:[%s8] sm:$0x1]
    %v1808 = vlaneseq
    %v1809 = vshrl.u32 %v1808, 7
    %v1810 = vsub.s32 0, %v1809
    %v1811 = vrot.slane %v1806, %v1810
    %v1814 = vsel %vm159, %v1288, 0
    %v1817 = vsel %vm159, %v1361, 0
    %v1820 = vsel %vm159, %v1434, 0
    %v1823 = vsel %vm159, %v1507, 0
    %v1826 = vsel %vm159, %v1580, 0
    %v1829 = vsel %vm159, %v1653, 0
    %v1832 = vsel %vm159, %v1726, 0
    %v1835 = vsel %vm159, %v1799, 0
    %1837 = vmatprep.subr.mxu0 0.0
    %1838 = vmatpush1.msra.mxu0 0.0
    %1839 = vmatprep.subr.mxu0 0.0
    %1840 = vmatpush1.msra.mxu0 0.0
    %1841 = vmatprep.subr.mxu0 0.0
    %1842 = vmatpush1.msra.mxu0 0.0
    %1843 = vmatprep.subr.mxu0 0.0
    %1844 = vmatpush1.msra.mxu0 0.0
    %1845 = vmatprep.subr.mxu0 0.0
    %1846 = vmatpush1.msra.mxu0 0.0
    %1847 = vmatprep.subr.mxu0 0.0
    %1848 = vmatpush1.msra.mxu0 0.0
    %1849 = vmatprep.subr.mxu0 0.0
    %1850 = vmatpush1.msra.mxu0 0.0
    %1851 = vmatprep.subr.mxu0 0.0
    %1852 = vmatpush1.msra.mxu0 0.0
    %1853 = vmatprep.subr.mxu0 0.0
    %1854 = vmatpush1.msra.mxu0 0.0
    %1855 = vmatprep.subr.mxu0 0.0
    %1856 = vmatpush1.msra.mxu0 0.0
    %1857 = vmatprep.subr.mxu0 0.0
    %1858 = vmatpush1.msra.mxu0 0.0
    %1859 = vmatprep.subr.mxu0 0.0
    %1860 = vmatpush1.msra.mxu0 0.0
    %1861 = vmatprep.subr.mxu0 0.0
    %1862 = vmatpush1.msra.mxu0 %v1805
    %1863 = vmatprep.subr.mxu0 0.0
    %1864 = vmatpush1.msra.mxu0 %v1804
    %1865 = vmatprep.subr.mxu0 0.0
    %1866 = vmatpush1.msra.mxu0 %v1803
    %1867 = vmatprep.subr.mxu0 0.0
    %1868 = vmatpush1.msra.mxu0 %v1802
    %1869 = vmatprep.subr.mxu0 0.0
    %1870 = vmatpush2.msra.mxu0 0.0
    %1871 = vmatprep.subr.mxu0 0.0
    %1872 = vmatpush2.msra.mxu0 0.0
    %1873 = vmatprep.subr.mxu0 0.0
    %1874 = vmatpush2.msra.mxu0 0.0
    %1875 = vmatprep.subr.mxu0 0.0
    %1876 = vmatpush2.msra.mxu0 0.0
    %1877 = vmatprep.subr.mxu0 0.0
    %1878 = vmatpush2.msra.mxu0 0.0
    %1879 = vmatprep.subr.mxu0 0.0
    %1880 = vmatpush2.msra.mxu0 0.0
    %1881 = vmatprep.subr.mxu0 0.0
    %1882 = vmatpush2.msra.mxu0 0.0
    %1883 = vmatprep.subr.mxu0 0.0
    %1884 = vmatpush2.msra.mxu0 0.0
    %1885 = vmatprep.subr.mxu0 0.0
    %1886 = vmatpush2.msra.mxu0 0.0
    %1887 = vmatprep.subr.mxu0 0.0
    %1888 = vmatpush2.msra.mxu0 0.0
    %1889 = vmatprep.subr.mxu0 0.0
    %1890 = vmatpush2.msra.mxu0 0.0
    %1891 = vmatprep.subr.mxu0 0.0
    %1892 = vmatpush2.msra.mxu0 0.0
    %1893 = vmatprep.subr.mxu0 0.0
    %1894 = vmatpush2.msra.mxu0 0.0
    %1895 = vmatprep.subr.mxu0 0.0
    %1896 = vmatpush2.msra.mxu0 0.0
    %1897 = vmatprep.subr.mxu0 0.0
    %1898 = vmatpush2.msra.mxu0 0.0
    %1899 = vmatprep.subr.mxu0 0.0
    %1900 = vmatpush2.msra.mxu0 0.0
    %1901 = vmatprep.mubr.f32.mxu0 0.0
    %1902 = vmatmul.mubr.f32.gmra.mxu0 %v1814
    %v1903 = vpop.f32.mrf.mxu0
    %v1904 = vadd.f32 %v1811, %v1903
    %v1905 = vpop.f32.mrf.mxu0
    %1906 = vmatprep.mubr.f32.mxu0 0.0
    %1907 = vmatmul.mubr.f32.gmra.mxu0 %v1817
    %v1908 = vpop.f32.mrf.mxu0
    %v1909 = vadd.f32 %v1811, %v1908
    %v1910 = vpop.f32.mrf.mxu0
    %1911 = vmatprep.mubr.f32.mxu0 0.0
    %1912 = vmatmul.mubr.f32.gmra.mxu0 %v1820
    %v1913 = vpop.f32.mrf.mxu0
    %v1914 = vadd.f32 %v1811, %v1913
    %v1915 = vpop.f32.mrf.mxu0
    %1916 = vmatprep.mubr.f32.mxu0 0.0
    %1917 = vmatmul.mubr.f32.gmra.mxu0 %v1823
    %v1918 = vpop.f32.mrf.mxu0
    %v1919 = vadd.f32 %v1811, %v1918
    %v1920 = vpop.f32.mrf.mxu0
    %1921 = vmatprep.mubr.f32.mxu0 0.0
    %1922 = vmatmul.mubr.f32.gmra.mxu0 %v1826
    %v1923 = vpop.f32.mrf.mxu0
    %v1924 = vadd.f32 %v1811, %v1923
    %v1925 = vpop.f32.mrf.mxu0
    %1926 = vmatprep.mubr.f32.mxu0 0.0
    %1927 = vmatmul.mubr.f32.gmra.mxu0 %v1829
    %v1928 = vpop.f32.mrf.mxu0
    %v1929 = vadd.f32 %v1811, %v1928
    %v1930 = vpop.f32.mrf.mxu0
    %1931 = vmatprep.mubr.f32.mxu0 0.0
    %1932 = vmatmul.mubr.f32.gmra.mxu0 %v1832
    %v1933 = vpop.f32.mrf.mxu0
    %v1934 = vadd.f32 %v1811, %v1933
    %v1935 = vpop.f32.mrf.mxu0
    %1936 = vmatprep.mubr.f32.mxu0 0.0
    %1937 = vmatmul.mubr.f32.gmra.mxu0 %v1835
    %v1938 = vpop.f32.mrf.mxu0
    %v1939 = vadd.f32 %v1811, %v1938
    %v1940 = vpop.f32.mrf.mxu0
    %1941 = vdwg.mxu0
    %vm1942 = vcmp.ge.f32.partialorder %v1904, 0.0
    %vm1943 = vcmp.ge.f32.partialorder %v1909, 0.0
    %vm1944 = vcmp.ge.f32.partialorder %v1914, 0.0
    %vm1945 = vcmp.ge.f32.partialorder %v1919, 0.0
    %vm1946 = vcmp.ge.f32.partialorder %v1924, 0.0
    %vm1947 = vcmp.ge.f32.partialorder %v1929, 0.0
    %vm1948 = vcmp.ge.f32.partialorder %v1934, 0.0
    %vm1949 = vcmp.ge.f32.partialorder %v1939, 0.0
    %v1950 = vmul.f32 %v1904, 0.01
    %v1951 = vmul.f32 %v1909, 0.01
    %v1952 = vmul.f32 %v1914, 0.01
    %v1953 = vmul.f32 %v1919, 0.01
    %v1954 = vmul.f32 %v1924, 0.01
    %v1955 = vmul.f32 %v1929, 0.01
    %v1956 = vmul.f32 %v1934, 0.01
    %v1957 = vmul.f32 %v1939, 0.01
    %v1958 = vsel %vm1942, %v1904, %v1950
    %v1959 = vsel %vm1943, %v1909, %v1951
    %v1960 = vsel %vm1944, %v1914, %v1952
    %v1961 = vsel %vm1945, %v1919, %v1953
    %v1962 = vsel %vm1946, %v1924, %v1954
    %v1963 = vsel %vm1947, %v1929, %v1955
    %v1964 = vsel %vm1948, %v1934, %v1956
    %v1965 = vsel %vm1949, %v1939, %v1957
    %v1966 = vld [vmem:[#allocation11] sm:$0xff]
    %v1967 = vld [vmem:[#allocation11 + $0x8] sm:$0xff]
    %v1968 = vld [vmem:[#allocation11 + $0x10] sm:$0xff]
    %v1969 = vld [vmem:[#allocation11 + $0x18] sm:$0xff]
    %v1970 = vld [vmem:[#allocation11 + $0x20] sm:$0xff]
    %v1971 = vld [vmem:[#allocation11 + $0x28] sm:$0xff]
    %v1972 = vld [vmem:[#allocation11 + $0x30] sm:$0xff]
    %v1973 = vld [vmem:[#allocation11 + $0x38] sm:$0xff]
    %v1974 = vld [vmem:[#allocation11 + $0x40] sm:$0xff]
    %v1975 = vld [vmem:[#allocation11 + $0x48] sm:$0xff]
    %v1976 = vld [vmem:[#allocation11 + $0x50] sm:$0xff]
    %v1977 = vld [vmem:[#allocation11 + $0x58] sm:$0xff]
    %v1978 = vld [vmem:[#allocation11 + $0x60] sm:$0xff]
    %v1979 = vld [vmem:[#allocation11 + $0x68] sm:$0xff]
    %v1980 = vld [vmem:[#allocation11 + $0x70] sm:$0xff]
    %v1981 = vld [vmem:[#allocation11 + $0x78] sm:$0xff]
    %v1982 = vld [vmem:[%s10] sm:$0x1]
    %v1984 = vlaneseq
    %v1985 = vshrl.u32 %v1984, 7
    %v1986 = vsub.s32 0, %v1985
    %v1987 = vrot.slane %v1982, %v1986
    %1989 = vmatprep.subr.mxu0 0.0
    %1990 = vmatpush1.msra.mxu0 %v1981
    %1991 = vmatprep.subr.mxu0 0.0
    %1992 = vmatpush1.msra.mxu0 %v1980
    %1993 = vmatprep.subr.mxu0 0.0
    %1994 = vmatpush1.msra.mxu0 %v1979
    %1995 = vmatprep.subr.mxu0 0.0
    %1996 = vmatpush1.msra.mxu0 %v1978
    %1997 = vmatprep.subr.mxu0 0.0
    %1998 = vmatpush1.msra.mxu0 %v1977
    %1999 = vmatprep.subr.mxu0 0.0
    %2000 = vmatpush1.msra.mxu0 %v1976
    %2001 = vmatprep.subr.mxu0 0.0
    %2002 = vmatpush1.msra.mxu0 %v1975
    %2003 = vmatprep.subr.mxu0 0.0
    %2004 = vmatpush1.msra.mxu0 %v1974
    %2005 = vmatprep.subr.mxu0 0.0
    %2006 = vmatpush1.msra.mxu0 %v1973
    %2007 = vmatprep.subr.mxu0 0.0
    %2008 = vmatpush1.msra.mxu0 %v1972
    %2009 = vmatprep.subr.mxu0 0.0
    %2010 = vmatpush1.msra.mxu0 %v1971
    %2011 = vmatprep.subr.mxu0 0.0
    %2012 = vmatpush1.msra.mxu0 %v1970
    %2013 = vmatprep.subr.mxu0 0.0
    %2014 = vmatpush1.msra.mxu0 %v1969
    %2015 = vmatprep.subr.mxu0 0.0
    %2016 = vmatpush1.msra.mxu0 %v1968
    %2017 = vmatprep.subr.mxu0 0.0
    %2018 = vmatpush1.msra.mxu0 %v1967
    %2019 = vmatprep.subr.mxu0 0.0
    %2020 = vmatpush1.msra.mxu0 %v1966
    %2021 = vmatprep.subr.mxu0 0.0
    %2022 = vmatpush2.msra.mxu0 0.0
    %2023 = vmatprep.subr.mxu0 0.0
    %2024 = vmatpush2.msra.mxu0 0.0
    %2025 = vmatprep.subr.mxu0 0.0
    %2026 = vmatpush2.msra.mxu0 0.0
    %2027 = vmatprep.subr.mxu0 0.0
    %2028 = vmatpush2.msra.mxu0 0.0
    %2029 = vmatprep.subr.mxu0 0.0
    %2030 = vmatpush2.msra.mxu0 0.0
    %2031 = vmatprep.subr.mxu0 0.0
    %2032 = vmatpush2.msra.mxu0 0.0
    %2033 = vmatprep.subr.mxu0 0.0
    %2034 = vmatpush2.msra.mxu0 0.0
    %2035 = vmatprep.subr.mxu0 0.0
    %2036 = vmatpush2.msra.mxu0 0.0
    %2037 = vmatprep.subr.mxu0 0.0
    %2038 = vmatpush2.msra.mxu0 0.0
    %2039 = vmatprep.subr.mxu0 0.0
    %2040 = vmatpush2.msra.mxu0 0.0
    %2041 = vmatprep.subr.mxu0 0.0
    %2042 = vmatpush2.msra.mxu0 0.0
    %2043 = vmatprep.subr.mxu0 0.0
    %2044 = vmatpush2.msra.mxu0 0.0
    %2045 = vmatprep.subr.mxu0 0.0
    %2046 = vmatpush2.msra.mxu0 0.0
    %2047 = vmatprep.subr.mxu0 0.0
    %2048 = vmatpush2.msra.mxu0 0.0
    %2049 = vmatprep.subr.mxu0 0.0
    %2050 = vmatpush2.msra.mxu0 0.0
    %2051 = vmatprep.subr.mxu0 0.0
    %2052 = vmatpush2.msra.mxu0 0.0
    %2053 = vmatprep.mubr.f32.mxu0 0.0
    %2054 = vmatmul.mubr.f32.gmra.mxu0 %v1958
    %v2055 = vpop.f32.mrf.mxu0
    %v2056 = vadd.f32 %v1987, %v2055
    %v2057 = vpop.f32.mrf.mxu0
    %2058 = vmatprep.mubr.f32.mxu0 0.0
    %2059 = vmatmul.mubr.f32.gmra.mxu0 %v1959
    %v2060 = vpop.f32.mrf.mxu0
    %v2061 = vadd.f32 %v1987, %v2060
    %v2062 = vpop.f32.mrf.mxu0
    %2063 = vmatprep.mubr.f32.mxu0 0.0
    %2064 = vmatmul.mubr.f32.gmra.mxu0 %v1960
    %v2065 = vpop.f32.mrf.mxu0
    %v2066 = vadd.f32 %v1987, %v2065
    %v2067 = vpop.f32.mrf.mxu0
    %2068 = vmatprep.mubr.f32.mxu0 0.0
    %2069 = vmatmul.mubr.f32.gmra.mxu0 %v1961
    %v2070 = vpop.f32.mrf.mxu0
    %v2071 = vadd.f32 %v1987, %v2070
    %v2072 = vpop.f32.mrf.mxu0
    %2073 = vmatprep.mubr.f32.mxu0 0.0
    %2074 = vmatmul.mubr.f32.gmra.mxu0 %v1962
    %v2075 = vpop.f32.mrf.mxu0
    %v2076 = vadd.f32 %v1987, %v2075
    %v2077 = vpop.f32.mrf.mxu0
    %2078 = vmatprep.mubr.f32.mxu0 0.0
    %2079 = vmatmul.mubr.f32.gmra.mxu0 %v1963
    %v2080 = vpop.f32.mrf.mxu0
    %v2081 = vadd.f32 %v1987, %v2080
    %v2082 = vpop.f32.mrf.mxu0
    %2083 = vmatprep.mubr.f32.mxu0 0.0
    %2084 = vmatmul.mubr.f32.gmra.mxu0 %v1964
    %v2085 = vpop.f32.mrf.mxu0
    %v2086 = vadd.f32 %v1987, %v2085
    %v2087 = vpop.f32.mrf.mxu0
    %2088 = vmatprep.mubr.f32.mxu0 0.0
    %2089 = vmatmul.mubr.f32.gmra.mxu0 %v1965
    %v2090 = vpop.f32.mrf.mxu0
    %v2091 = vadd.f32 %v1987, %v2090
    %v2092 = vpop.f32.mrf.mxu0
    %2093 = vdwg.mxu0
    %vm2094 = vcmp.ge.f32.partialorder %v2056, 0.0
    %vm2095 = vcmp.ge.f32.partialorder %v2061, 0.0
    %vm2096 = vcmp.ge.f32.partialorder %v2066, 0.0
    %vm2097 = vcmp.ge.f32.partialorder %v2071, 0.0
    %vm2098 = vcmp.ge.f32.partialorder %v2076, 0.0
    %vm2099 = vcmp.ge.f32.partialorder %v2081, 0.0
    %vm2100 = vcmp.ge.f32.partialorder %v2086, 0.0
    %vm2101 = vcmp.ge.f32.partialorder %v2091, 0.0
    %v2102 = vmul.f32 %v2056, 0.01
    %v2103 = vmul.f32 %v2061, 0.01
    %v2104 = vmul.f32 %v2066, 0.01
    %v2105 = vmul.f32 %v2071, 0.01
    %v2106 = vmul.f32 %v2076, 0.01
    %v2107 = vmul.f32 %v2081, 0.01
    %v2108 = vmul.f32 %v2086, 0.01
    %v2109 = vmul.f32 %v2091, 0.01
    %v2110 = vsel %vm2094, %v2056, %v2102
    %v2111 = vsel %vm2095, %v2061, %v2103
    %v2112 = vsel %vm2096, %v2066, %v2104
    %v2113 = vsel %vm2097, %v2071, %v2105
    %v2114 = vsel %vm2098, %v2076, %v2106
    %v2115 = vsel %vm2099, %v2081, %v2107
    %v2116 = vsel %vm2100, %v2086, %v2108
    %v2117 = vsel %vm2101, %v2091, %v2109
    %v2118 = vld [vmem:[#allocation13] sm:$0xff]
    %v2119 = vld [vmem:[#allocation13 + $0x8] sm:$0xff]
    %v2120 = vld [vmem:[#allocation13 + $0x10] sm:$0xff]
    %v2121 = vld [vmem:[#allocation13 + $0x18] sm:$0xff]
    %v2122 = vld [vmem:[#allocation13 + $0x20] sm:$0xff]
    %v2123 = vld [vmem:[#allocation13 + $0x28] sm:$0xff]
    %v2124 = vld [vmem:[#allocation13 + $0x30] sm:$0xff]
    %v2125 = vld [vmem:[#allocation13 + $0x38] sm:$0xff]
    %v2126 = vld [vmem:[#allocation13 + $0x40] sm:$0xff]
    %v2127 = vld [vmem:[#allocation13 + $0x48] sm:$0xff]
    %v2128 = vld [vmem:[#allocation13 + $0x50] sm:$0xff]
    %v2129 = vld [vmem:[#allocation13 + $0x58] sm:$0xff]
    %v2130 = vld [vmem:[#allocation13 + $0x60] sm:$0xff]
    %v2131 = vld [vmem:[#allocation13 + $0x68] sm:$0xff]
    %v2132 = vld [vmem:[#allocation13 + $0x70] sm:$0xff]
    %v2133 = vld [vmem:[#allocation13 + $0x78] sm:$0xff]
    %v2134 = vld [vmem:[%s12] sm:$0x1]
    %v2136 = vlaneseq
    %v2137 = vshrl.u32 %v2136, 7
    %v2138 = vsub.s32 0, %v2137
    %v2139 = vrot.slane %v2134, %v2138
    %2141 = vmatprep.subr.mxu0 0.0
    %2142 = vmatpush1.msra.mxu0 %v2133
    %2143 = vmatprep.subr.mxu0 0.0
    %2144 = vmatpush1.msra.mxu0 %v2132
    %2145 = vmatprep.subr.mxu0 0.0
    %2146 = vmatpush1.msra.mxu0 %v2131
    %2147 = vmatprep.subr.mxu0 0.0
    %2148 = vmatpush1.msra.mxu0 %v2130
    %2149 = vmatprep.subr.mxu0 0.0
    %2150 = vmatpush1.msra.mxu0 %v2129
    %2151 = vmatprep.subr.mxu0 0.0
    %2152 = vmatpush1.msra.mxu0 %v2128
    %2153 = vmatprep.subr.mxu0 0.0
    %2154 = vmatpush1.msra.mxu0 %v2127
    %2155 = vmatprep.subr.mxu0 0.0
    %2156 = vmatpush1.msra.mxu0 %v2126
    %2157 = vmatprep.subr.mxu0 0.0
    %2158 = vmatpush1.msra.mxu0 %v2125
    %2159 = vmatprep.subr.mxu0 0.0
    %2160 = vmatpush1.msra.mxu0 %v2124
    %2161 = vmatprep.subr.mxu0 0.0
    %2162 = vmatpush1.msra.mxu0 %v2123
    %2163 = vmatprep.subr.mxu0 0.0
    %2164 = vmatpush1.msra.mxu0 %v2122
    %2165 = vmatprep.subr.mxu0 0.0
    %2166 = vmatpush1.msra.mxu0 %v2121
    %2167 = vmatprep.subr.mxu0 0.0
    %2168 = vmatpush1.msra.mxu0 %v2120
    %2169 = vmatprep.subr.mxu0 0.0
    %2170 = vmatpush1.msra.mxu0 %v2119
    %2171 = vmatprep.subr.mxu0 0.0
    %2172 = vmatpush1.msra.mxu0 %v2118
    %2173 = vmatprep.subr.mxu0 0.0
    %2174 = vmatpush2.msra.mxu0 0.0
    %2175 = vmatprep.subr.mxu0 0.0
    %2176 = vmatpush2.msra.mxu0 0.0
    %2177 = vmatprep.subr.mxu0 0.0
    %2178 = vmatpush2.msra.mxu0 0.0
    %2179 = vmatprep.subr.mxu0 0.0
    %2180 = vmatpush2.msra.mxu0 0.0
    %2181 = vmatprep.subr.mxu0 0.0
    %2182 = vmatpush2.msra.mxu0 0.0
    %2183 = vmatprep.subr.mxu0 0.0
    %2184 = vmatpush2.msra.mxu0 0.0
    %2185 = vmatprep.subr.mxu0 0.0
    %2186 = vmatpush2.msra.mxu0 0.0
    %2187 = vmatprep.subr.mxu0 0.0
    %2188 = vmatpush2.msra.mxu0 0.0
    %2189 = vmatprep.subr.mxu0 0.0
    %2190 = vmatpush2.msra.mxu0 0.0
    %2191 = vmatprep.subr.mxu0 0.0
    %2192 = vmatpush2.msra.mxu0 0.0
    %2193 = vmatprep.subr.mxu0 0.0
    %2194 = vmatpush2.msra.mxu0 0.0
    %2195 = vmatprep.subr.mxu0 0.0
    %2196 = vmatpush2.msra.mxu0 0.0
    %2197 = vmatprep.subr.mxu0 0.0
    %2198 = vmatpush2.msra.mxu0 0.0
    %2199 = vmatprep.subr.mxu0 0.0
    %2200 = vmatpush2.msra.mxu0 0.0
    %2201 = vmatprep.subr.mxu0 0.0
    %2202 = vmatpush2.msra.mxu0 0.0
    %2203 = vmatprep.subr.mxu0 0.0
    %2204 = vmatpush2.msra.mxu0 0.0
    %2205 = vmatprep.mubr.f32.mxu0 0.0
    %2206 = vmatmul.mubr.f32.gmra.mxu0 %v2110
    %v2207 = vpop.f32.mrf.mxu0
    %v2208 = vadd.f32 %v2139, %v2207
    %v2209 = vpop.f32.mrf.mxu0
    %2210 = vmatprep.mubr.f32.mxu0 0.0
    %2211 = vmatmul.mubr.f32.gmra.mxu0 %v2111
    %v2212 = vpop.f32.mrf.mxu0
    %v2213 = vadd.f32 %v2139, %v2212
    %v2214 = vpop.f32.mrf.mxu0
    %2215 = vmatprep.mubr.f32.mxu0 0.0
    %2216 = vmatmul.mubr.f32.gmra.mxu0 %v2112
    %v2217 = vpop.f32.mrf.mxu0
    %v2218 = vadd.f32 %v2139, %v2217
    %v2219 = vpop.f32.mrf.mxu0
    %2220 = vmatprep.mubr.f32.mxu0 0.0
    %2221 = vmatmul.mubr.f32.gmra.mxu0 %v2113
    %v2222 = vpop.f32.mrf.mxu0
    %v2223 = vadd.f32 %v2139, %v2222
    %v2224 = vpop.f32.mrf.mxu0
    %2225 = vmatprep.mubr.f32.mxu0 0.0
    %2226 = vmatmul.mubr.f32.gmra.mxu0 %v2114
    %v2227 = vpop.f32.mrf.mxu0
    %v2228 = vadd.f32 %v2139, %v2227
    %v2229 = vpop.f32.mrf.mxu0
    %2230 = vmatprep.mubr.f32.mxu0 0.0
    %2231 = vmatmul.mubr.f32.gmra.mxu0 %v2115
    %v2232 = vpop.f32.mrf.mxu0
    %v2233 = vadd.f32 %v2139, %v2232
    %v2234 = vpop.f32.mrf.mxu0
    %2235 = vmatprep.mubr.f32.mxu0 0.0
    %2236 = vmatmul.mubr.f32.gmra.mxu0 %v2116
    %v2237 = vpop.f32.mrf.mxu0
    %v2238 = vadd.f32 %v2139, %v2237
    %v2239 = vpop.f32.mrf.mxu0
    %2240 = vmatprep.mubr.f32.mxu0 0.0
    %2241 = vmatmul.mubr.f32.gmra.mxu0 %v2117
    %v2242 = vpop.f32.mrf.mxu0
    %v2243 = vadd.f32 %v2139, %v2242
    %v2244 = vpop.f32.mrf.mxu0
    %2245 = vdwg.mxu0
    %2246 = vmax.xlane.f32.xlu0 %v2208
    %v2247 = vpop.xlane.xlu0 %2246
    %2248 = vmax.xlane.f32.xlu0 %v2213
    %v2249 = vpop.xlane.xlu0 %2248
    %2250 = vmax.xlane.f32.xlu0 %v2218
    %v2251 = vpop.xlane.xlu0 %2250
    %2252 = vmax.xlane.f32.xlu0 %v2223
    %v2253 = vpop.xlane.xlu0 %2252
    %2254 = vmax.xlane.f32.xlu0 %v2228
    %v2255 = vpop.xlane.xlu0 %2254
    %2256 = vmax.xlane.f32.xlu0 %v2233
    %v2257 = vpop.xlane.xlu0 %2256
    %2258 = vmax.xlane.f32.xlu0 %v2238
    %v2259 = vpop.xlane.xlu0 %2258
    %2260 = vmax.xlane.f32.xlu0 %v2243
    %v2261 = vpop.xlane.xlu0 %2260
    %v2262 = vsub.f32 %v2208, %v2247
    %v2263 = vsub.f32 %v2213, %v2249
    %v2264 = vsub.f32 %v2218, %v2251
    %v2265 = vsub.f32 %v2223, %v2253
    %v2266 = vsub.f32 %v2228, %v2255
    %v2267 = vsub.f32 %v2233, %v2257
    %v2268 = vsub.f32 %v2238, %v2259
    %v2269 = vsub.f32 %v2243, %v2261
    %v2270 = vmul.f32 %v2262, 1.442695
    %v2271 = vpow.pop %v2270
    %v2272 = vmul.f32 %v2263, 1.442695
    %v2273 = vpow.pop %v2272
    %v2274 = vmul.f32 %v2264, 1.442695
    %v2275 = vpow.pop %v2274
    %v2276 = vmul.f32 %v2265, 1.442695
    %v2277 = vpow.pop %v2276
    %v2278 = vmul.f32 %v2266, 1.442695
    %v2279 = vpow.pop %v2278
    %v2280 = vmul.f32 %v2267, 1.442695
    %v2281 = vpow.pop %v2280
    %v2282 = vmul.f32 %v2268, 1.442695
    %v2283 = vpow.pop %v2282
    %v2284 = vmul.f32 %v2269, 1.442695
    %v2285 = vpow.pop %v2284
    %2286 = vadd.xlane.f32.xlu0 %v2271
    %v2287 = vpop.xlane.xlu0 %2286
    %2288 = vadd.xlane.f32.xlu0 %v2273
    %v2289 = vpop.xlane.xlu0 %2288
    %2290 = vadd.xlane.f32.xlu0 %v2275
    %v2291 = vpop.xlane.xlu0 %2290
    %2292 = vadd.xlane.f32.xlu0 %v2277
    %v2293 = vpop.xlane.xlu0 %2292
    %2294 = vadd.xlane.f32.xlu0 %v2279
    %v2295 = vpop.xlane.xlu0 %2294
    %2296 = vadd.xlane.f32.xlu0 %v2281
    %v2297 = vpop.xlane.xlu0 %2296
    %2298 = vadd.xlane.f32.xlu0 %v2283
    %v2299 = vpop.xlane.xlu0 %2298
    %2300 = vadd.xlane.f32.xlu0 %v2285
    %v2301 = vpop.xlane.xlu0 %2300
    %v2302 = vrcp.pop %v2287
    %v2303 = vmul.f32 %v2271, %v2302
    %v2304 = vrcp.pop %v2289
    %v2305 = vmul.f32 %v2273, %v2304
    %v2306 = vrcp.pop %v2291
    %v2307 = vmul.f32 %v2275, %v2306
    %v2308 = vrcp.pop %v2293
    %v2309 = vmul.f32 %v2277, %v2308
    %v2310 = vrcp.pop %v2295
    %v2311 = vmul.f32 %v2279, %v2310
    %v2312 = vrcp.pop %v2297
    %v2313 = vmul.f32 %v2281, %v2312
    %v2314 = vrcp.pop %v2299
    %v2315 = vmul.f32 %v2283, %v2314
    %v2316 = vrcp.pop %v2301
    %v2317 = vmul.f32 %v2285, %v2316
    %2318 = vst [vmem:[#allocation14] sm:$0xff] %v2303
    %2319 = vst [vmem:[#allocation14 + $0x8] sm:$0xff] %v2305
    %2320 = vst [vmem:[#allocation14 + $0x10] sm:$0xff] %v2307
    %2321 = vst [vmem:[#allocation14 + $0x18] sm:$0xff] %v2309
    %2322 = vst [vmem:[#allocation14 + $0x20] sm:$0xff] %v2311
    %2323 = vst [vmem:[#allocation14 + $0x28] sm:$0xff] %v2313
    %2324 = vst [vmem:[#allocation14 + $0x30] sm:$0xff] %v2315
    %2325 = vst [vmem:[#allocation14 + $0x38] sm:$0xff] %v2317
    // Predicated region
    $region82: #{tpu_custom_call.1} parent=1 // pred_check
      _
    $region83: #{tpu_custom_call.1} parent=1 // pred_check_branch
      %2327 = sbr.rel (0) target = $region85
    $region84: #{tpu_custom_call.1} parent=1 // pred_region
      %s2329 = ssub.s32 1024, 1024
      %2330 = vsyncadd [#allocation4], %s2329
      %s2331 = sshll.u32 [#allocation14], 4
      %s2332 = int_to_ptr.vmem [resolvable:$true] %s2331
      %2337 = dma.vmem_to_hbm [thread:$0]  %s2332, 1024, %s13, [#allocation4], 128, 128, 8
    $region85: #{tpu_custom_call.1} parent=1 // pred_fallthru
      _
    // Predicated region
    $region86: #{tpu_custom_call.1} parent=1 // pred_check
      _
    $region87: #{tpu_custom_call.1} parent=1 // pred_check_branch
      %2339 = sbr.rel (0) target = $region89
    $region88: #{tpu_custom_call.1} parent=1 // pred_region
      %2340 = dma.done [#allocation4], 1024
    $region89: #{tpu_custom_call.1} parent=1 // pred_fallthru
      _
    %2341 = vsyncpa [#allocation3], 1
    %2342 = vsyncpa [#allocation6], 1
    %2343 = vsyncpa [#allocation9], 1
    %2344 = vsyncpa [#allocation12], 1
    %2345 = vsyncpa [#allocation4], 1

</llo_original>
